<compile_context>
chip_gen: v7x
topology: tpu7x:2x2x1
jax: 0.10.0
libtpu: 0.0.40
codegen_flags: <defaults>
</compile_context>

<pallas_src>
import jax
import jax.numpy as jnp
from jax.experimental import pallas as pl
from jax.experimental.pallas import tpu as pltpu


# ----------------------------------------------------------------------------
# Fused forward kernel (TCN stack -> trans -> local_pre -> GAT -> add)
# ----------------------------------------------------------------------------
def _build_fused_kernel(*, n_layers, kt, dilations, B, N, T, nheads, f_out):
    BN = B * N
    BNT = BN * T

    def kernel(*refs):
        o_ref = refs[-1]
        it = iter(refs[:-1])
        x_ref = next(it)
        layer_refs = [(next(it), next(it), next(it), next(it))
                      for _ in range(n_layers)]
        wtr_ref = next(it)     # (T, F_in, C_last)
        btr_ref = next(it)     # (F_in, 1)
        wloc_ref = next(it)    # (F_out, F_in)
        bloc_ref = next(it)    # (F_out, 1)
        wg_ref = next(it)      # (nheads*F_out, F_in)
        asrc_ref = next(it)    # (nheads, nheads*F_out)  block-diagonal
        adst_ref = next(it)    # (nheads, nheads*F_out)  block-diagonal
        adj_ref = next(it)     # (N, N)

        # ------------- TCN stack (dilated causal conv + ReLU + 1x1 residual) ----
        # h layout: (C, T*B*N), lane index = t*BN + (b*N + n)  -> 128 lanes.
        h = x_ref[...]
        for l in range(n_layers):
            w_ref, b_ref, wres_ref, bres_ref = layer_refs[l]
            d = dilations[l]
            acc = None
            for j in range(kt):                    # static, unrolled taps
                s = (kt - 1 - j) * d               # causal right-shift (time steps)
                if s == 0:
                    xj = h
                elif s >= T:
                    continue                        # tap sees only zero padding
                else:
                    w_lanes = s * BN                # t-major layout: shift whole lanes
                    xj = jnp.concatenate(
                        [jnp.zeros((h.shape[0], w_lanes), jnp.float32),
                         h[:, :BNT - w_lanes]], axis=1)
                contrib = jnp.dot(w_ref[j], xj,
                                  preferred_element_type=jnp.float32)
                acc = contrib if acc is None else acc + contrib
            y = jnp.maximum(acc + b_ref[...], 0.0)
            res = jnp.dot(wres_ref[...], h,
                          preferred_element_type=jnp.float32) + bres_ref[...]
            h = jnp.maximum(y + res, 0.0)

        # ------------- trans (Conv2d kernel (1,T)) + tcn2out ---------------------
        # feat_t[f, bn] = sum_{c,t} Wtr[f,c,t] * h[c, t*BN + bn] + btr[f]
        ft = None
        for t in range(T):                          # static, unrolled
            contrib = jnp.dot(wtr_ref[t], h[:, t * BN:(t + 1) * BN],
                              preferred_element_type=jnp.float32)
            ft = contrib if ft is None else ft + contrib
        feat_t = ft + btr_ref[...]                  # (F_in, BN)  == tcn2out(x)^T

        # ------------- local = local_pre(x) --------------------------------------
        local_t = jnp.dot(wloc_ref[...], feat_t,
                          preferred_element_type=jnp.float32) + bloc_ref[...]

        # ------------- neighbor = GAT(x): all heads & batches at once ------------
        hfeat = jnp.dot(wg_ref[...], feat_t,
                        preferred_element_type=jnp.float32)    # (nheads*F_out, BN)
        f_src = jnp.dot(asrc_ref[...], hfeat,
                        preferred_element_type=jnp.float32)    # (nheads, BN)
        f_dst = jnp.dot(adst_ref[...], hfeat,
                        preferred_element_type=jnp.float32)    # (nheads, BN)
        f_src_t = jnp.transpose(f_src)                          # (BN, nheads)
        adj_mask = adj_ref[...] > 0.0
        inv_nheads = 1.0 / nheads

        for b in range(B):                          # static, unrolled
            bs = b * N
            nb = None
            for hh in range(nheads):                # static, unrolled
                hs = hh * f_out
                hf_t = hfeat[hs:hs + f_out, bs:bs + N]          # (F_out, N) = hfeat^T
                fs_col = f_src_t[bs:bs + N, hh:hh + 1]          # (N, 1)
                fd_row = f_dst[hh:hh + 1, bs:bs + N]            # (1, N)
                e = fs_col + fd_row                             # e[i,j]=fs[i]+fd[j]
                e = jnp.where(e > 0, e, 0.2 * e)                # LeakyReLU(0.2)
                e = jnp.where(adj_mask, e, -1e9)                # mask non-edges
                e = e - jnp.max(e, axis=-1, keepdims=True)
                p = jnp.exp(e)
                inv_l = pl.reciprocal(jnp.sum(p, axis=-1, keepdims=True),
                                      approx=True)
                alpha = p * inv_l                               # row softmax
                contrib = jnp.dot(hf_t, jnp.transpose(alpha),
                                  preferred_element_type=jnp.float32)  # (F_out, N)
                nb = contrib if nb is None else nb + contrib
            o_ref[:, bs:bs + N] = local_t[:, bs:bs + N] + nb * inv_nheads

    return kernel


# ----------------------------------------------------------------------------
# DueModel forward (wrapper: layout + parameter packing is plain-JAX glue)
# ----------------------------------------------------------------------------
def due_model_forward(x, params, adj, *, kt, nheads):
    B, C0, N, T = x.shape
    BN = B * N
    layers = params["tcn"]
    n_layers = len(layers)
    dilations = [2 ** i for i in range(n_layers)]

    f_in = params["trans"]["w"].shape[0]
    f_out = params["local"]["w"].shape[0]

    # x: NCHW (B, C, N, T) -> (C, T*B*N), lane index = t*BN + (b*N + n)
    x2 = jnp.transpose(x, (1, 3, 0, 2)).reshape(C0, T * BN)

    inputs = [x2]
    for layer in layers:
        inputs.append(jnp.transpose(layer["w"], (2, 0, 1)))     # (kt, C_out, C_in)
        inputs.append(layer["b"])                                # (C_out, 1)
        inputs.append(layer["w_res"])                            # (C_out, C_in)
        inputs.append(layer["b_res"])                            # (C_out, 1)

    wtr = params["trans"]["w"][:, :, 0, :]                       # (F_in, C_last, T)
    inputs.append(jnp.transpose(wtr, (2, 0, 1)))                 # (T, F_in, C_last)
    inputs.append(params["trans"]["b"].reshape(f_in, 1))         # (F_in, 1)

    inputs.append(params["local"]["w"])                          # (F_out, F_in)
    inputs.append(params["local"]["b"].reshape(f_out, 1))        # (F_out, 1)

    w_gat = params["gat"]["W"]                                   # (nheads, F_in, F_out)
    inputs.append(jnp.transpose(w_gat, (0, 2, 1)).reshape(nheads * f_out, f_in))
    a = params["gat"]["a"]                                       # (nheads, 2, F_out)
    eye = jnp.eye(nheads, dtype=jnp.float32)
    a_src = a[:, 0, :]
    a_dst = a[:, 1, :]
    a_src_blk = (eye[:, :, None] * a_src[None, :, :]).reshape(nheads, nheads * f_out)
    a_dst_blk = (eye[:, :, None] * a_dst[None, :, :]).reshape(nheads, nheads * f_out)
    inputs.append(a_src_blk)
    inputs.append(a_dst_blk)
    inputs.append(adj.astype(jnp.float32))

    kernel = _build_fused_kernel(n_layers=n_layers, kt=kt, dilations=dilations,
                                 B=B, N=N, T=T, nheads=nheads, f_out=f_out)

    out_t = pl.pallas_call(
        kernel,
        out_shape=jax.ShapeDtypeStruct((f_out, BN), jnp.float32),
        compiler_params=pltpu.CompilerParams(vmem_limit_bytes=32 * 1024 * 1024),
    )(*inputs)

    # (F_out, B*N) -> (B, N, F_out)
    return jnp.transpose(out_t).reshape(B, N, f_out)


# ----------------------------------------------------------------------------
# Deterministic parameter construction + demo run
# ----------------------------------------------------------------------------
def make_params(key, tcn_channels, gat_channels, nheads, kt, time_in):
    params = {"tcn": []}
    k = key
    for i in range(len(tcn_channels) - 1):
        c_in, c_out = tcn_channels[i], tcn_channels[i + 1]
        k, k1, k2, k3, k4 = jax.random.split(k, 5)
        params["tcn"].append({
            "w": 0.3 * jax.random.normal(k1, (c_out, c_in, kt), jnp.float32),
            "b": 0.05 * jax.random.normal(k2, (c_out, 1), jnp.float32),
            "w_res": 0.3 * jax.random.normal(k3, (c_out, c_in), jnp.float32),
            "b_res": 0.05 * jax.random.normal(k4, (c_out, 1), jnp.float32),
        })
    c_tcn_out = tcn_channels[-1]
    f_in, f_out = gat_channels[0], gat_channels[-1]
    k, k1, k2, k3, k4, k5, k6 = jax.random.split(k, 7)
    params["trans"] = {
        "w": 0.2 * jax.random.normal(k1, (f_in, c_tcn_out, 1, time_in), jnp.float32),
        "b": 0.05 * jax.random.normal(k2, (1, f_in), jnp.float32),
    }
    params["local"] = {
        "w": 0.2 * jax.random.normal(k3, (f_out, f_in), jnp.float32),   # torch Linear layout
        "b": 0.05 * jax.random.normal(k4, (1, f_out), jnp.float32),
    }
    params["gat"] = {
        "W": 0.2 * jax.random.normal(k5, (nheads, f_in, f_out), jnp.float32),
        "a": 0.2 * jax.random.normal(k6, (nheads, 2, f_out), jnp.float32),
    }
    return params


if __name__ == "__main__":
    # Small shapes consistent with the module's forward.
    B, N, T = 2, 8, 8
    tcn_channel_hide = [4, 8, 8]          # input channels 4, two TCN blocks
    gat_channel_hide = [16, 8]            # F_in after `trans`, F_out
    nheads = 2
    kt = 2                                # TCN kernel size (Bai-TCN default)
    time_len_inout = (T, 1)

    key = jax.random.PRNGKey(0)
    k_x, k_p = jax.random.split(key)
    x = jax.random.normal(k_x, (B, tcn_channel_hide[0], N, T), jnp.float32)

    # ring adjacency with self-loops
    idx = jnp.arange(N)
    d = jnp.abs(idx[:, None] - idx[None, :])
    adj = ((d <= 1) | (d == N - 1)).astype(jnp.float32)

    params = make_params(k_p, tcn_channel_hide, gat_channel_hide, nheads, kt,
                         time_len_inout[0])

    out = due_model_forward(x, params, adj, kt=kt, nheads=nheads)
    out = jax.block_until_ready(out)

    assert out.shape == (B, N, gat_channel_hide[-1]), out.shape
    assert bool(jnp.all(jnp.isfinite(out)))
    print("KERNEL_OK")
</pallas_src>

<mosaic_0001>
module attributes {stable_mosaic.version = 11 : i64} {
  func.func @kernel(%arg0: memref<4x128xf32, #tpu.memory_space<vmem>>, %arg1: memref<2x8x4xf32, #tpu.memory_space<vmem>>, %arg2: memref<8x1xf32, #tpu.memory_space<vmem>>, %arg3: memref<8x4xf32, #tpu.memory_space<vmem>>, %arg4: memref<8x1xf32, #tpu.memory_space<vmem>>, %arg5: memref<2x8x8xf32, #tpu.memory_space<vmem>>, %arg6: memref<8x1xf32, #tpu.memory_space<vmem>>, %arg7: memref<8x8xf32, #tpu.memory_space<vmem>>, %arg8: memref<8x1xf32, #tpu.memory_space<vmem>>, %arg9: memref<8x16x8xf32, #tpu.memory_space<vmem>>, %arg10: memref<16x1xf32, #tpu.memory_space<vmem>>, %arg11: memref<8x16xf32, #tpu.memory_space<vmem>>, %arg12: memref<8x1xf32, #tpu.memory_space<vmem>>, %arg13: memref<16x16xf32, #tpu.memory_space<vmem>>, %arg14: memref<2x16xf32, #tpu.memory_space<vmem>>, %arg15: memref<2x16xf32, #tpu.memory_space<vmem>>, %arg16: memref<8x8xf32, #tpu.memory_space<vmem>>, %arg17: memref<8x16xf32, #tpu.memory_space<vmem>>) attributes {dimension_semantics = [], scalar_prefetch = 0 : i64, scratch_operands = 0 : i64, tpu.core_type = #tpu.core_type<tc>} {
    %c0 = arith.constant 0 : index
    %c0_0 = arith.constant 0 : index
    %0 = vector.load %arg0[%c0, %c0_0] : memref<4x128xf32, #tpu.memory_space<vmem>>, vector<4x128xf32>
    %cst = arith.constant 0.000000e+00 : f32
    %1 = vector.broadcast %cst : f32 to vector<4x16xf32>
    %2 = vector.extract_strided_slice %0 {offsets = [0, 0], sizes = [4, 112], strides = [1, 1]} : vector<4x128xf32> to vector<4x112xf32>
    %3 = tpu.concatenate %1, %2 in 1 : vector<4x16xf32>, vector<4x112xf32> -> vector<4x128xf32>
    %c0_1 = arith.constant 0 : index
    %c0_2 = arith.constant 0 : index
    %c0_3 = arith.constant 0 : index
    %4 = vector.load %arg1[%c0_1, %c0_2, %c0_3] : memref<2x8x4xf32, #tpu.memory_space<vmem>>, vector<1x8x4xf32>
    %5 = vector.shape_cast %4 : vector<1x8x4xf32> to vector<8x4xf32>
    %cst_4 = arith.constant dense<0.000000e+00> : vector<8x128xf32>
    %6 = tpu.matmul %5, %3, %cst_4 {dimension_numbers = #tpu.dot_dimension_numbers<[1], [0], [0], [1], [0, 0, 1, 1], [], []>} : vector<8x4xf32>, vector<4x128xf32>, vector<8x128xf32> -> vector<8x128xf32>
    %c1 = arith.constant 1 : index
    %c0_5 = arith.constant 0 : index
    %c0_6 = arith.constant 0 : index
    %7 = vector.load %arg1[%c1, %c0_5, %c0_6] : memref<2x8x4xf32, #tpu.memory_space<vmem>>, vector<1x8x4xf32>
    %8 = vector.shape_cast %7 : vector<1x8x4xf32> to vector<8x4xf32>
    %cst_7 = arith.constant dense<0.000000e+00> : vector<8x128xf32>
    %9 = tpu.matmul %8, %0, %cst_7 {dimension_numbers = #tpu.dot_dimension_numbers<[1], [0], [0], [1], [0, 0, 1, 1], [], []>} : vector<8x4xf32>, vector<4x128xf32>, vector<8x128xf32> -> vector<8x128xf32>
    %10 = arith.addf %6, %9 : vector<8x128xf32>
    %c0_8 = arith.constant 0 : index
    %c0_9 = arith.constant 0 : index
    %11 = vector.load %arg2[%c0_8, %c0_9] : memref<8x1xf32, #tpu.memory_space<vmem>>, vector<8x1xf32>
    %12 = vector.broadcast %11 : vector<8x1xf32> to vector<8x128xf32>
    %13 = arith.addf %10, %12 : vector<8x128xf32>
    %cst_10 = arith.constant 0.000000e+00 : f32
    %14 = vector.broadcast %cst_10 : f32 to vector<8x128xf32>
    %15 = arith.maximumf %13, %14 : vector<8x128xf32>
    %c0_11 = arith.constant 0 : index
    %c0_12 = arith.constant 0 : index
    %16 = vector.load %arg3[%c0_11, %c0_12] : memref<8x4xf32, #tpu.memory_space<vmem>>, vector<8x4xf32>
    %cst_13 = arith.constant dense<0.000000e+00> : vector<8x128xf32>
    %17 = tpu.matmul %16, %0, %cst_13 {dimension_numbers = #tpu.dot_dimension_numbers<[1], [0], [0], [1], [0, 0, 1, 1], [], []>} : vector<8x4xf32>, vector<4x128xf32>, vector<8x128xf32> -> vector<8x128xf32>
    %c0_14 = arith.constant 0 : index
    %c0_15 = arith.constant 0 : index
    %18 = vector.load %arg4[%c0_14, %c0_15] : memref<8x1xf32, #tpu.memory_space<vmem>>, vector<8x1xf32>
    %19 = vector.broadcast %18 : vector<8x1xf32> to vector<8x128xf32>
    %20 = arith.addf %17, %19 : vector<8x128xf32>
    %21 = arith.addf %15, %20 : vector<8x128xf32>
    %cst_16 = arith.constant 0.000000e+00 : f32
    %22 = vector.broadcast %cst_16 : f32 to vector<8x128xf32>
    %23 = arith.maximumf %21, %22 : vector<8x128xf32>
    %cst_17 = arith.constant 0.000000e+00 : f32
    %24 = vector.broadcast %cst_17 : f32 to vector<8x32xf32>
    %25 = vector.extract_strided_slice %23 {offsets = [0, 0], sizes = [8, 96], strides = [1, 1]} : vector<8x128xf32> to vector<8x96xf32>
    %26 = tpu.concatenate %24, %25 in 1 : vector<8x32xf32>, vector<8x96xf32> -> vector<8x128xf32>
    %c0_18 = arith.constant 0 : index
    %c0_19 = arith.constant 0 : index
    %c0_20 = arith.constant 0 : index
    %27 = vector.load %arg5[%c0_18, %c0_19, %c0_20] : memref<2x8x8xf32, #tpu.memory_space<vmem>>, vector<1x8x8xf32>
    %28 = vector.shape_cast %27 : vector<1x8x8xf32> to vector<8x8xf32>
    %cst_21 = arith.constant dense<0.000000e+00> : vector<8x128xf32>
    %29 = tpu.matmul %28, %26, %cst_21 {dimension_numbers = #tpu.dot_dimension_numbers<[1], [0], [0], [1], [0, 0, 1, 1], [], []>} : vector<8x8xf32>, vector<8x128xf32>, vector<8x128xf32> -> vector<8x128xf32>
    %c1_22 = arith.constant 1 : index
    %c0_23 = arith.constant 0 : index
    %c0_24 = arith.constant 0 : index
    %30 = vector.load %arg5[%c1_22, %c0_23, %c0_24] : memref<2x8x8xf32, #tpu.memory_space<vmem>>, vector<1x8x8xf32>
    %31 = vector.shape_cast %30 : vector<1x8x8xf32> to vector<8x8xf32>
    %cst_25 = arith.constant dense<0.000000e+00> : vector<8x128xf32>
    %32 = tpu.matmul %31, %23, %cst_25 {dimension_numbers = #tpu.dot_dimension_numbers<[1], [0], [0], [1], [0, 0, 1, 1], [], []>} : vector<8x8xf32>, vector<8x128xf32>, vector<8x128xf32> -> vector<8x128xf32>
    %33 = arith.addf %29, %32 : vector<8x128xf32>
    %c0_26 = arith.constant 0 : index
    %c0_27 = arith.constant 0 : index
    %34 = vector.load %arg6[%c0_26, %c0_27] : memref<8x1xf32, #tpu.memory_space<vmem>>, vector<8x1xf32>
    %35 = vector.broadcast %34 : vector<8x1xf32> to vector<8x128xf32>
    %36 = arith.addf %33, %35 : vector<8x128xf32>
    %cst_28 = arith.constant 0.000000e+00 : f32
    %37 = vector.broadcast %cst_28 : f32 to vector<8x128xf32>
    %38 = arith.maximumf %36, %37 : vector<8x128xf32>
    %c0_29 = arith.constant 0 : index
    %c0_30 = arith.constant 0 : index
    %39 = vector.load %arg7[%c0_29, %c0_30] : memref<8x8xf32, #tpu.memory_space<vmem>>, vector<8x8xf32>
    %cst_31 = arith.constant dense<0.000000e+00> : vector<8x128xf32>
    %40 = tpu.matmul %39, %23, %cst_31 {dimension_numbers = #tpu.dot_dimension_numbers<[1], [0], [0], [1], [0, 0, 1, 1], [], []>} : vector<8x8xf32>, vector<8x128xf32>, vector<8x128xf32> -> vector<8x128xf32>
    %c0_32 = arith.constant 0 : index
    %c0_33 = arith.constant 0 : index
    %41 = vector.load %arg8[%c0_32, %c0_33] : memref<8x1xf32, #tpu.memory_space<vmem>>, vector<8x1xf32>
    %42 = vector.broadcast %41 : vector<8x1xf32> to vector<8x128xf32>
    %43 = arith.addf %40, %42 : vector<8x128xf32>
    %44 = arith.addf %38, %43 : vector<8x128xf32>
    %cst_34 = arith.constant 0.000000e+00 : f32
    %45 = vector.broadcast %cst_34 : f32 to vector<8x128xf32>
    %46 = arith.maximumf %44, %45 : vector<8x128xf32>
    %c0_35 = arith.constant 0 : index
    %c0_36 = arith.constant 0 : index
    %c0_37 = arith.constant 0 : index
    %47 = vector.load %arg9[%c0_35, %c0_36, %c0_37] : memref<8x16x8xf32, #tpu.memory_space<vmem>>, vector<1x16x8xf32>
    %48 = vector.shape_cast %47 : vector<1x16x8xf32> to vector<16x8xf32>
    %49 = vector.extract_strided_slice %46 {offsets = [0, 0], sizes = [8, 16], strides = [1, 1]} : vector<8x128xf32> to vector<8x16xf32>
    %cst_38 = arith.constant dense<0.000000e+00> : vector<16x16xf32>
    %50 = tpu.matmul %48, %49, %cst_38 {dimension_numbers = #tpu.dot_dimension_numbers<[1], [0], [0], [1], [0, 0, 1, 1], [], []>} : vector<16x8xf32>, vector<8x16xf32>, vector<16x16xf32> -> vector<16x16xf32>
    %c1_39 = arith.constant 1 : index
    %c0_40 = arith.constant 0 : index
    %c0_41 = arith.constant 0 : index
    %51 = vector.load %arg9[%c1_39, %c0_40, %c0_41] : memref<8x16x8xf32, #tpu.memory_space<vmem>>, vector<1x16x8xf32>
    %52 = vector.shape_cast %51 : vector<1x16x8xf32> to vector<16x8xf32>
    %53 = vector.extract_strided_slice %46 {offsets = [0, 16], sizes = [8, 16], strides = [1, 1]} : vector<8x128xf32> to vector<8x16xf32>
    %cst_42 = arith.constant dense<0.000000e+00> : vector<16x16xf32>
    %54 = tpu.matmul %52, %53, %cst_42 {dimension_numbers = #tpu.dot_dimension_numbers<[1], [0], [0], [1], [0, 0, 1, 1], [], []>} : vector<16x8xf32>, vector<8x16xf32>, vector<16x16xf32> -> vector<16x16xf32>
    %55 = arith.addf %50, %54 : vector<16x16xf32>
    %c2 = arith.constant 2 : index
    %c0_43 = arith.constant 0 : index
    %c0_44 = arith.constant 0 : index
    %56 = vector.load %arg9[%c2, %c0_43, %c0_44] : memref<8x16x8xf32, #tpu.memory_space<vmem>>, vector<1x16x8xf32>
    %57 = vector.shape_cast %56 : vector<1x16x8xf32> to vector<16x8xf32>
    %58 = vector.extract_strided_slice %46 {offsets = [0, 32], sizes = [8, 16], strides = [1, 1]} : vector<8x128xf32> to vector<8x16xf32>
    %cst_45 = arith.constant dense<0.000000e+00> : vector<16x16xf32>
    %59 = tpu.matmul %57, %58, %cst_45 {dimension_numbers = #tpu.dot_dimension_numbers<[1], [0], [0], [1], [0, 0, 1, 1], [], []>} : vector<16x8xf32>, vector<8x16xf32>, vector<16x16xf32> -> vector<16x16xf32>
    %60 = arith.addf %55, %59 : vector<16x16xf32>
    %c3 = arith.constant 3 : index
    %c0_46 = arith.constant 0 : index
    %c0_47 = arith.constant 0 : index
    %61 = vector.load %arg9[%c3, %c0_46, %c0_47] : memref<8x16x8xf32, #tpu.memory_space<vmem>>, vector<1x16x8xf32>
    %62 = vector.shape_cast %61 : vector<1x16x8xf32> to vector<16x8xf32>
    %63 = vector.extract_strided_slice %46 {offsets = [0, 48], sizes = [8, 16], strides = [1, 1]} : vector<8x128xf32> to vector<8x16xf32>
    %cst_48 = arith.constant dense<0.000000e+00> : vector<16x16xf32>
    %64 = tpu.matmul %62, %63, %cst_48 {dimension_numbers = #tpu.dot_dimension_numbers<[1], [0], [0], [1], [0, 0, 1, 1], [], []>} : vector<16x8xf32>, vector<8x16xf32>, vector<16x16xf32> -> vector<16x16xf32>
    %65 = arith.addf %60, %64 : vector<16x16xf32>
    %c4 = arith.constant 4 : index
    %c0_49 = arith.constant 0 : index
    %c0_50 = arith.constant 0 : index
    %66 = vector.load %arg9[%c4, %c0_49, %c0_50] : memref<8x16x8xf32, #tpu.memory_space<vmem>>, vector<1x16x8xf32>
    %67 = vector.shape_cast %66 : vector<1x16x8xf32> to vector<16x8xf32>
    %68 = vector.extract_strided_slice %46 {offsets = [0, 64], sizes = [8, 16], strides = [1, 1]} : vector<8x128xf32> to vector<8x16xf32>
    %cst_51 = arith.constant dense<0.000000e+00> : vector<16x16xf32>
    %69 = tpu.matmul %67, %68, %cst_51 {dimension_numbers = #tpu.dot_dimension_numbers<[1], [0], [0], [1], [0, 0, 1, 1], [], []>} : vector<16x8xf32>, vector<8x16xf32>, vector<16x16xf32> -> vector<16x16xf32>
    %70 = arith.addf %65, %69 : vector<16x16xf32>
    %c5 = arith.constant 5 : index
    %c0_52 = arith.constant 0 : index
    %c0_53 = arith.constant 0 : index
    %71 = vector.load %arg9[%c5, %c0_52, %c0_53] : memref<8x16x8xf32, #tpu.memory_space<vmem>>, vector<1x16x8xf32>
    %72 = vector.shape_cast %71 : vector<1x16x8xf32> to vector<16x8xf32>
    %73 = vector.extract_strided_slice %46 {offsets = [0, 80], sizes = [8, 16], strides = [1, 1]} : vector<8x128xf32> to vector<8x16xf32>
    %cst_54 = arith.constant dense<0.000000e+00> : vector<16x16xf32>
    %74 = tpu.matmul %72, %73, %cst_54 {dimension_numbers = #tpu.dot_dimension_numbers<[1], [0], [0], [1], [0, 0, 1, 1], [], []>} : vector<16x8xf32>, vector<8x16xf32>, vector<16x16xf32> -> vector<16x16xf32>
    %75 = arith.addf %70, %74 : vector<16x16xf32>
    %c6 = arith.constant 6 : index
    %c0_55 = arith.constant 0 : index
    %c0_56 = arith.constant 0 : index
    %76 = vector.load %arg9[%c6, %c0_55, %c0_56] : memref<8x16x8xf32, #tpu.memory_space<vmem>>, vector<1x16x8xf32>
    %77 = vector.shape_cast %76 : vector<1x16x8xf32> to vector<16x8xf32>
    %78 = vector.extract_strided_slice %46 {offsets = [0, 96], sizes = [8, 16], strides = [1, 1]} : vector<8x128xf32> to vector<8x16xf32>
    %cst_57 = arith.constant dense<0.000000e+00> : vector<16x16xf32>
    %79 = tpu.matmul %77, %78, %cst_57 {dimension_numbers = #tpu.dot_dimension_numbers<[1], [0], [0], [1], [0, 0, 1, 1], [], []>} : vector<16x8xf32>, vector<8x16xf32>, vector<16x16xf32> -> vector<16x16xf32>
    %80 = arith.addf %75, %79 : vector<16x16xf32>
    %c7 = arith.constant 7 : index
    %c0_58 = arith.constant 0 : index
    %c0_59 = arith.constant 0 : index
    %81 = vector.load %arg9[%c7, %c0_58, %c0_59] : memref<8x16x8xf32, #tpu.memory_space<vmem>>, vector<1x16x8xf32>
    %82 = vector.shape_cast %81 : vector<1x16x8xf32> to vector<16x8xf32>
    %83 = vector.extract_strided_slice %46 {offsets = [0, 112], sizes = [8, 16], strides = [1, 1]} : vector<8x128xf32> to vector<8x16xf32>
    %cst_60 = arith.constant dense<0.000000e+00> : vector<16x16xf32>
    %84 = tpu.matmul %82, %83, %cst_60 {dimension_numbers = #tpu.dot_dimension_numbers<[1], [0], [0], [1], [0, 0, 1, 1], [], []>} : vector<16x8xf32>, vector<8x16xf32>, vector<16x16xf32> -> vector<16x16xf32>
    %85 = arith.addf %80, %84 : vector<16x16xf32>
    %c0_61 = arith.constant 0 : index
    %c0_62 = arith.constant 0 : index
    %86 = vector.load %arg10[%c0_61, %c0_62] : memref<16x1xf32, #tpu.memory_space<vmem>>, vector<16x1xf32>
    %87 = vector.broadcast %86 : vector<16x1xf32> to vector<16x16xf32>
    %88 = arith.addf %85, %87 : vector<16x16xf32>
    %c0_63 = arith.constant 0 : index
    %c0_64 = arith.constant 0 : index
    %89 = vector.load %arg11[%c0_63, %c0_64] : memref<8x16xf32, #tpu.memory_space<vmem>>, vector<8x16xf32>
    %cst_65 = arith.constant dense<0.000000e+00> : vector<8x16xf32>
    %90 = tpu.matmul %89, %88, %cst_65 {dimension_numbers = #tpu.dot_dimension_numbers<[1], [0], [0], [1], [0, 0, 1, 1], [], []>} : vector<8x16xf32>, vector<16x16xf32>, vector<8x16xf32> -> vector<8x16xf32>
    %c0_66 = arith.constant 0 : index
    %c0_67 = arith.constant 0 : index
    %91 = vector.load %arg12[%c0_66, %c0_67] : memref<8x1xf32, #tpu.memory_space<vmem>>, vector<8x1xf32>
    %92 = vector.broadcast %91 : vector<8x1xf32> to vector<8x16xf32>
    %93 = arith.addf %90, %92 : vector<8x16xf32>
    %c0_68 = arith.constant 0 : index
    %c0_69 = arith.constant 0 : index
    %94 = vector.load %arg13[%c0_68, %c0_69] : memref<16x16xf32, #tpu.memory_space<vmem>>, vector<16x16xf32>
    %cst_70 = arith.constant dense<0.000000e+00> : vector<16x16xf32>
    %95 = tpu.matmul %94, %88, %cst_70 {dimension_numbers = #tpu.dot_dimension_numbers<[1], [0], [0], [1], [0, 0, 1, 1], [], []>} : vector<16x16xf32>, vector<16x16xf32>, vector<16x16xf32> -> vector<16x16xf32>
    %c0_71 = arith.constant 0 : index
    %c0_72 = arith.constant 0 : index
    %96 = vector.load %arg14[%c0_71, %c0_72] : memref<2x16xf32, #tpu.memory_space<vmem>>, vector<2x16xf32>
    %cst_73 = arith.constant dense<0.000000e+00> : vector<2x16xf32>
    %97 = tpu.matmul %96, %95, %cst_73 {dimension_numbers = #tpu.dot_dimension_numbers<[1], [0], [0], [1], [0, 0, 1, 1], [], []>} : vector<2x16xf32>, vector<16x16xf32>, vector<2x16xf32> -> vector<2x16xf32>
    %c0_74 = arith.constant 0 : index
    %c0_75 = arith.constant 0 : index
    %98 = vector.load %arg15[%c0_74, %c0_75] : memref<2x16xf32, #tpu.memory_space<vmem>>, vector<2x16xf32>
    %cst_76 = arith.constant dense<0.000000e+00> : vector<2x16xf32>
    %99 = tpu.matmul %98, %95, %cst_76 {dimension_numbers = #tpu.dot_dimension_numbers<[1], [0], [0], [1], [0, 0, 1, 1], [], []>} : vector<2x16xf32>, vector<16x16xf32>, vector<2x16xf32> -> vector<2x16xf32>
    %100 = tpu.transpose %97, [1, 0] : vector<2x16xf32> -> vector<16x2xf32>
    %c0_77 = arith.constant 0 : index
    %c0_78 = arith.constant 0 : index
    %101 = vector.load %arg16[%c0_77, %c0_78] : memref<8x8xf32, #tpu.memory_space<vmem>>, vector<8x8xf32>
    %cst_79 = arith.constant 0.000000e+00 : f32
    %102 = vector.broadcast %cst_79 : f32 to vector<8x8xf32>
    %103 = arith.cmpf ogt, %101, %102 : vector<8x8xf32>
    %104 = vector.extract_strided_slice %95 {offsets = [0, 0], sizes = [8, 8], strides = [1, 1]} : vector<16x16xf32> to vector<8x8xf32>
    %105 = vector.extract_strided_slice %100 {offsets = [0, 0], sizes = [8, 1], strides = [1, 1]} : vector<16x2xf32> to vector<8x1xf32>
    %106 = vector.extract_strided_slice %99 {offsets = [0, 0], sizes = [1, 8], strides = [1, 1]} : vector<2x16xf32> to vector<1x8xf32>
    %107 = vector.broadcast %105 : vector<8x1xf32> to vector<8x8xf32>
    %108 = vector.broadcast %106 : vector<1x8xf32> to vector<8x8xf32>
    %109 = arith.addf %107, %108 : vector<8x8xf32>
    %cst_80 = arith.constant 0.000000e+00 : f32
    %110 = vector.broadcast %cst_80 : f32 to vector<8x8xf32>
    %111 = arith.cmpf ogt, %109, %110 : vector<8x8xf32>
    %cst_81 = arith.constant 2.000000e-01 : f32
    %112 = vector.broadcast %cst_81 : f32 to vector<8x8xf32>
    %113 = arith.mulf %112, %109 : vector<8x8xf32>
    %114 = arith.select %111, %109, %113 : vector<8x8xi1>, vector<8x8xf32>
    %cst_82 = arith.constant -1.000000e+09 : f32
    %115 = vector.broadcast %cst_82 : f32 to vector<8x8xf32>
    %116 = arith.select %103, %114, %115 : vector<8x8xi1>, vector<8x8xf32>
    %cst_83 = arith.constant dense<0xFF800000> : vector<8xf32>
    %117 = vector.multi_reduction <maximumf>, %116, %cst_83 [1] : vector<8x8xf32> to vector<8xf32>
    %118 = vector.shape_cast %117 : vector<8xf32> to vector<8x1xf32>
    %119 = vector.broadcast %118 : vector<8x1xf32> to vector<8x8xf32>
    %120 = arith.subf %116, %119 : vector<8x8xf32>
    %121 = math.exp %120 : vector<8x8xf32>
    %cst_84 = arith.constant dense<0.000000e+00> : vector<8xf32>
    %122 = vector.multi_reduction <add>, %121, %cst_84 [1] : vector<8x8xf32> to vector<8xf32>
    %123 = vector.shape_cast %122 : vector<8xf32> to vector<8x1xf32>
    %124 = tpu.reciprocal %123 {approx = true} : vector<8x1xf32> -> vector<8x1xf32>
    %125 = vector.broadcast %124 : vector<8x1xf32> to vector<8x8xf32>
    %126 = arith.mulf %121, %125 : vector<8x8xf32>
    %127 = tpu.transpose %126, [1, 0] : vector<8x8xf32> -> vector<8x8xf32>
    %cst_85 = arith.constant dense<0.000000e+00> : vector<8x8xf32>
    %128 = tpu.matmul %104, %127, %cst_85 {dimension_numbers = #tpu.dot_dimension_numbers<[1], [0], [0], [1], [0, 0, 1, 1], [], []>} : vector<8x8xf32>, vector<8x8xf32>, vector<8x8xf32> -> vector<8x8xf32>
    %129 = vector.extract_strided_slice %95 {offsets = [8, 0], sizes = [8, 8], strides = [1, 1]} : vector<16x16xf32> to vector<8x8xf32>
    %130 = vector.extract_strided_slice %100 {offsets = [0, 1], sizes = [8, 1], strides = [1, 1]} : vector<16x2xf32> to vector<8x1xf32>
    %131 = vector.extract_strided_slice %99 {offsets = [1, 0], sizes = [1, 8], strides = [1, 1]} : vector<2x16xf32> to vector<1x8xf32>
    %132 = vector.broadcast %130 : vector<8x1xf32> to vector<8x8xf32>
    %133 = vector.broadcast %131 : vector<1x8xf32> to vector<8x8xf32>
    %134 = arith.addf %132, %133 : vector<8x8xf32>
    %cst_86 = arith.constant 0.000000e+00 : f32
    %135 = vector.broadcast %cst_86 : f32 to vector<8x8xf32>
    %136 = arith.cmpf ogt, %134, %135 : vector<8x8xf32>
    %cst_87 = arith.constant 2.000000e-01 : f32
    %137 = vector.broadcast %cst_87 : f32 to vector<8x8xf32>
    %138 = arith.mulf %137, %134 : vector<8x8xf32>
    %139 = arith.select %136, %134, %138 : vector<8x8xi1>, vector<8x8xf32>
    %cst_88 = arith.constant -1.000000e+09 : f32
    %140 = vector.broadcast %cst_88 : f32 to vector<8x8xf32>
    %141 = arith.select %103, %139, %140 : vector<8x8xi1>, vector<8x8xf32>
    %cst_89 = arith.constant dense<0xFF800000> : vector<8xf32>
    %142 = vector.multi_reduction <maximumf>, %141, %cst_89 [1] : vector<8x8xf32> to vector<8xf32>
    %143 = vector.shape_cast %142 : vector<8xf32> to vector<8x1xf32>
    %144 = vector.broadcast %143 : vector<8x1xf32> to vector<8x8xf32>
    %145 = arith.subf %141, %144 : vector<8x8xf32>
    %146 = math.exp %145 : vector<8x8xf32>
    %cst_90 = arith.constant dense<0.000000e+00> : vector<8xf32>
    %147 = vector.multi_reduction <add>, %146, %cst_90 [1] : vector<8x8xf32> to vector<8xf32>
    %148 = vector.shape_cast %147 : vector<8xf32> to vector<8x1xf32>
    %149 = tpu.reciprocal %148 {approx = true} : vector<8x1xf32> -> vector<8x1xf32>
    %150 = vector.broadcast %149 : vector<8x1xf32> to vector<8x8xf32>
    %151 = arith.mulf %146, %150 : vector<8x8xf32>
    %152 = tpu.transpose %151, [1, 0] : vector<8x8xf32> -> vector<8x8xf32>
    %cst_91 = arith.constant dense<0.000000e+00> : vector<8x8xf32>
    %153 = tpu.matmul %129, %152, %cst_91 {dimension_numbers = #tpu.dot_dimension_numbers<[1], [0], [0], [1], [0, 0, 1, 1], [], []>} : vector<8x8xf32>, vector<8x8xf32>, vector<8x8xf32> -> vector<8x8xf32>
    %154 = arith.addf %128, %153 : vector<8x8xf32>
    %155 = vector.extract_strided_slice %93 {offsets = [0, 0], sizes = [8, 8], strides = [1, 1]} : vector<8x16xf32> to vector<8x8xf32>
    %cst_92 = arith.constant 5.000000e-01 : f32
    %156 = vector.broadcast %cst_92 : f32 to vector<8x8xf32>
    %157 = arith.mulf %154, %156 : vector<8x8xf32>
    %158 = arith.addf %155, %157 : vector<8x8xf32>
    %c0_93 = arith.constant 0 : index
    %c0_94 = arith.constant 0 : index
    %159 = vector.load %arg17[%c0_93, %c0_94] : memref<8x16xf32, #tpu.memory_space<vmem>>, vector<8x8xf32>
    tpu.vector_store %arg17[%c0_93, %c0_94], %158 {strides = array<i32>} : memref<8x16xf32, #tpu.memory_space<vmem>>, vector<8x8xf32>,
    %160 = vector.extract_strided_slice %95 {offsets = [0, 8], sizes = [8, 8], strides = [1, 1]} : vector<16x16xf32> to vector<8x8xf32>
    %161 = vector.extract_strided_slice %100 {offsets = [8, 0], sizes = [8, 1], strides = [1, 1]} : vector<16x2xf32> to vector<8x1xf32>
    %162 = vector.extract_strided_slice %99 {offsets = [0, 8], sizes = [1, 8], strides = [1, 1]} : vector<2x16xf32> to vector<1x8xf32>
    %163 = vector.broadcast %161 : vector<8x1xf32> to vector<8x8xf32>
    %164 = vector.broadcast %162 : vector<1x8xf32> to vector<8x8xf32>
    %165 = arith.addf %163, %164 : vector<8x8xf32>
    %cst_95 = arith.constant 0.000000e+00 : f32
    %166 = vector.broadcast %cst_95 : f32 to vector<8x8xf32>
    %167 = arith.cmpf ogt, %165, %166 : vector<8x8xf32>
    %cst_96 = arith.constant 2.000000e-01 : f32
    %168 = vector.broadcast %cst_96 : f32 to vector<8x8xf32>
    %169 = arith.mulf %168, %165 : vector<8x8xf32>
    %170 = arith.select %167, %165, %169 : vector<8x8xi1>, vector<8x8xf32>
    %cst_97 = arith.constant -1.000000e+09 : f32
    %171 = vector.broadcast %cst_97 : f32 to vector<8x8xf32>
    %172 = arith.select %103, %170, %171 : vector<8x8xi1>, vector<8x8xf32>
    %cst_98 = arith.constant dense<0xFF800000> : vector<8xf32>
    %173 = vector.multi_reduction <maximumf>, %172, %cst_98 [1] : vector<8x8xf32> to vector<8xf32>
    %174 = vector.shape_cast %173 : vector<8xf32> to vector<8x1xf32>
    %175 = vector.broadcast %174 : vector<8x1xf32> to vector<8x8xf32>
    %176 = arith.subf %172, %175 : vector<8x8xf32>
    %177 = math.exp %176 : vector<8x8xf32>
    %cst_99 = arith.constant dense<0.000000e+00> : vector<8xf32>
    %178 = vector.multi_reduction <add>, %177, %cst_99 [1] : vector<8x8xf32> to vector<8xf32>
    %179 = vector.shape_cast %178 : vector<8xf32> to vector<8x1xf32>
    %180 = tpu.reciprocal %179 {approx = true} : vector<8x1xf32> -> vector<8x1xf32>
    %181 = vector.broadcast %180 : vector<8x1xf32> to vector<8x8xf32>
    %182 = arith.mulf %177, %181 : vector<8x8xf32>
    %183 = tpu.transpose %182, [1, 0] : vector<8x8xf32> -> vector<8x8xf32>
    %cst_100 = arith.constant dense<0.000000e+00> : vector<8x8xf32>
    %184 = tpu.matmul %160, %183, %cst_100 {dimension_numbers = #tpu.dot_dimension_numbers<[1], [0], [0], [1], [0, 0, 1, 1], [], []>} : vector<8x8xf32>, vector<8x8xf32>, vector<8x8xf32> -> vector<8x8xf32>
    %185 = vector.extract_strided_slice %95 {offsets = [8, 8], sizes = [8, 8], strides = [1, 1]} : vector<16x16xf32> to vector<8x8xf32>
    %186 = vector.extract_strided_slice %100 {offsets = [8, 1], sizes = [8, 1], strides = [1, 1]} : vector<16x2xf32> to vector<8x1xf32>
    %187 = vector.extract_strided_slice %99 {offsets = [1, 8], sizes = [1, 8], strides = [1, 1]} : vector<2x16xf32> to vector<1x8xf32>
    %188 = vector.broadcast %186 : vector<8x1xf32> to vector<8x8xf32>
    %189 = vector.broadcast %187 : vector<1x8xf32> to vector<8x8xf32>
    %190 = arith.addf %188, %189 : vector<8x8xf32>
    %cst_101 = arith.constant 0.000000e+00 : f32
    %191 = vector.broadcast %cst_101 : f32 to vector<8x8xf32>
    %192 = arith.cmpf ogt, %190, %191 : vector<8x8xf32>
    %cst_102 = arith.constant 2.000000e-01 : f32
    %193 = vector.broadcast %cst_102 : f32 to vector<8x8xf32>
    %194 = arith.mulf %193, %190 : vector<8x8xf32>
    %195 = arith.select %192, %190, %194 : vector<8x8xi1>, vector<8x8xf32>
    %cst_103 = arith.constant -1.000000e+09 : f32
    %196 = vector.broadcast %cst_103 : f32 to vector<8x8xf32>
    %197 = arith.select %103, %195, %196 : vector<8x8xi1>, vector<8x8xf32>
    %cst_104 = arith.constant dense<0xFF800000> : vector<8xf32>
    %198 = vector.multi_reduction <maximumf>, %197, %cst_104 [1] : vector<8x8xf32> to vector<8xf32>
    %199 = vector.shape_cast %198 : vector<8xf32> to vector<8x1xf32>
    %200 = vector.broadcast %199 : vector<8x1xf32> to vector<8x8xf32>
    %201 = arith.subf %197, %200 : vector<8x8xf32>
    %202 = math.exp %201 : vector<8x8xf32>
    %cst_105 = arith.constant dense<0.000000e+00> : vector<8xf32>
    %203 = vector.multi_reduction <add>, %202, %cst_105 [1] : vector<8x8xf32> to vector<8xf32>
    %204 = vector.shape_cast %203 : vector<8xf32> to vector<8x1xf32>
    %205 = tpu.reciprocal %204 {approx = true} : vector<8x1xf32> -> vector<8x1xf32>
    %206 = vector.broadcast %205 : vector<8x1xf32> to vector<8x8xf32>
    %207 = arith.mulf %202, %206 : vector<8x8xf32>
    %208 = tpu.transpose %207, [1, 0] : vector<8x8xf32> -> vector<8x8xf32>
    %cst_106 = arith.constant dense<0.000000e+00> : vector<8x8xf32>
    %209 = tpu.matmul %185, %208, %cst_106 {dimension_numbers = #tpu.dot_dimension_numbers<[1], [0], [0], [1], [0, 0, 1, 1], [], []>} : vector<8x8xf32>, vector<8x8xf32>, vector<8x8xf32> -> vector<8x8xf32>
    %210 = arith.addf %184, %209 : vector<8x8xf32>
    %211 = vector.extract_strided_slice %93 {offsets = [0, 8], sizes = [8, 8], strides = [1, 1]} : vector<8x16xf32> to vector<8x8xf32>
    %cst_107 = arith.constant 5.000000e-01 : f32
    %212 = vector.broadcast %cst_107 : f32 to vector<8x8xf32>
    %213 = arith.mulf %210, %212 : vector<8x8xf32>
    %214 = arith.addf %211, %213 : vector<8x8xf32>
    %c0_108 = arith.constant 0 : index
    %c8 = arith.constant 8 : index
    %215 = vector.load %arg17[%c0_108, %c8] : memref<8x16xf32, #tpu.memory_space<vmem>>, vector<8x8xf32>
    tpu.vector_store %arg17[%c0_108, %c8], %214 {strides = array<i32>} : memref<8x16xf32, #tpu.memory_space<vmem>>, vector<8x8xf32>,
    return
  }
}

</mosaic_0001>

<llo_original>
// kernel: tpu_custom_call.1
$region0: #{tpu_custom_call.1}
  #allocation0 [shape = 'u32[]', space=smem, size = 0x4, offset = 0x4, fixed_abs, tag = 'smem constant byte address 0x4 - core index']
  #allocation1 [shape = 'u32[144,128]{1,0:T(1,128)}', space=vmem, size = 0x12000, scoped, tag = 'internal scratch']
  %s0 = inlined_call_operand.vmem [shape: f32[4,128], index: 0, kind: input, shape index: {}]
  %s1 = inlined_call_operand.vmem [shape: f32[2,8,4], index: 1, kind: input, shape index: {}]
  %s2 = inlined_call_operand.vmem [shape: f32[8,1], index: 2, kind: input, shape index: {}]
  %s3 = inlined_call_operand.vmem [shape: f32[8,4], index: 3, kind: input, shape index: {}]
  %s4 = inlined_call_operand.vmem [shape: f32[8,1], index: 4, kind: input, shape index: {}]
  %s5 = inlined_call_operand.vmem [shape: f32[2,8,8], index: 5, kind: input, shape index: {}]
  %s6 = inlined_call_operand.vmem [shape: f32[8,1], index: 6, kind: input, shape index: {}]
  %s7 = inlined_call_operand.vmem [shape: f32[8,8], index: 7, kind: input, shape index: {}]
  %s8 = inlined_call_operand.vmem [shape: f32[8,1], index: 8, kind: input, shape index: {}]
  %s9 = inlined_call_operand.vmem [shape: f32[8,16,8], index: 9, kind: input, shape index: {}]
  %s10 = inlined_call_operand.vmem [shape: f32[16,1], index: 10, kind: input, shape index: {}]
  %s11 = inlined_call_operand.vmem [shape: f32[8,16], index: 11, kind: input, shape index: {}]
  %s12 = inlined_call_operand.vmem [shape: f32[8,1], index: 12, kind: input, shape index: {}]
  %s13 = inlined_call_operand.vmem [shape: f32[16,16], index: 13, kind: input, shape index: {}]
  %s14 = inlined_call_operand.vmem [shape: f32[2,16], index: 14, kind: input, shape index: {}]
  %s15 = inlined_call_operand.vmem [shape: f32[2,16], index: 15, kind: input, shape index: {}]
  %s16 = inlined_call_operand.vmem [shape: f32[8,8], index: 16, kind: input, shape index: {}]
  %s17 = inlined_call_operand.hbm [shape: f32[8,16], index: 17, kind: output, shape index: {}]
  %s18 = sld [smem:[#allocation0]]
  $region78: #{tpu_custom_call.1} parent=0
    _
  %s20 = ssub.s32 1, %s18
  %s21 = scalar_select 0, %s20, %s18
  $region1: #{tpu_custom_call.1} parent=0
    #allocation2 [shape = 'u8[4096]{0}', space=vmem, size = 0x1000, scoped, tag = 'output window, operand 0, single buffered']
    #allocation3 [shape = 's32[1]{0}', space=sflag, size = 0x4, scoped, tag = 'scoped memory for tpu_custom_call.1']
    %22 = vsyncpa [#allocation3], 0
    // Predicated region
    $region2: #{tpu_custom_call.1} parent=1 // pred_check
      _
    $region3: #{tpu_custom_call.1} parent=1 // pred_check_branch
      %24 = sbr.rel (0) target = $region5
    $region4: #{tpu_custom_call.1} parent=1 // pred_region
      _
    $region5: #{tpu_custom_call.1} parent=1 // pred_fallthru
      _
    // Predicated region
    $region6: #{tpu_custom_call.1} parent=1 // pred_check
      _
    $region7: #{tpu_custom_call.1} parent=1 // pred_check_branch
      %26 = sbr.rel (0) target = $region9
    $region8: #{tpu_custom_call.1} parent=1 // pred_region
      _
    $region9: #{tpu_custom_call.1} parent=1 // pred_fallthru
      _
    // Predicated region
    $region10: #{tpu_custom_call.1} parent=1 // pred_check
      _
    $region11: #{tpu_custom_call.1} parent=1 // pred_check_branch
      %28 = sbr.rel (0) target = $region13
    $region12: #{tpu_custom_call.1} parent=1 // pred_region
      _
    $region13: #{tpu_custom_call.1} parent=1 // pred_fallthru
      _
    // Predicated region
    $region14: #{tpu_custom_call.1} parent=1 // pred_check
      _
    $region15: #{tpu_custom_call.1} parent=1 // pred_check_branch
      %30 = sbr.rel (0) target = $region17
    $region16: #{tpu_custom_call.1} parent=1 // pred_region
      _
    $region17: #{tpu_custom_call.1} parent=1 // pred_fallthru
      _
    // Predicated region
    $region18: #{tpu_custom_call.1} parent=1 // pred_check
      _
    $region19: #{tpu_custom_call.1} parent=1 // pred_check_branch
      %32 = sbr.rel (0) target = $region21
    $region20: #{tpu_custom_call.1} parent=1 // pred_region
      _
    $region21: #{tpu_custom_call.1} parent=1 // pred_fallthru
      _
    // Predicated region
    $region22: #{tpu_custom_call.1} parent=1 // pred_check
      _
    $region23: #{tpu_custom_call.1} parent=1 // pred_check_branch
      %34 = sbr.rel (0) target = $region25
    $region24: #{tpu_custom_call.1} parent=1 // pred_region
      _
    $region25: #{tpu_custom_call.1} parent=1 // pred_fallthru
      _
    // Predicated region
    $region26: #{tpu_custom_call.1} parent=1 // pred_check
      _
    $region27: #{tpu_custom_call.1} parent=1 // pred_check_branch
      %36 = sbr.rel (0) target = $region29
    $region28: #{tpu_custom_call.1} parent=1 // pred_region
      _
    $region29: #{tpu_custom_call.1} parent=1 // pred_fallthru
      _
    // Predicated region
    $region30: #{tpu_custom_call.1} parent=1 // pred_check
      _
    $region31: #{tpu_custom_call.1} parent=1 // pred_check_branch
      %38 = sbr.rel (0) target = $region33
    $region32: #{tpu_custom_call.1} parent=1 // pred_region
      _
    $region33: #{tpu_custom_call.1} parent=1 // pred_fallthru
      _
    // Predicated region
    $region34: #{tpu_custom_call.1} parent=1 // pred_check
      _
    $region35: #{tpu_custom_call.1} parent=1 // pred_check_branch
      %40 = sbr.rel (0) target = $region37
    $region36: #{tpu_custom_call.1} parent=1 // pred_region
      _
    $region37: #{tpu_custom_call.1} parent=1 // pred_fallthru
      _
    // Predicated region
    $region38: #{tpu_custom_call.1} parent=1 // pred_check
      _
    $region39: #{tpu_custom_call.1} parent=1 // pred_check_branch
      %42 = sbr.rel (0) target = $region41
    $region40: #{tpu_custom_call.1} parent=1 // pred_region
      _
    $region41: #{tpu_custom_call.1} parent=1 // pred_fallthru
      _
    // Predicated region
    $region42: #{tpu_custom_call.1} parent=1 // pred_check
      _
    $region43: #{tpu_custom_call.1} parent=1 // pred_check_branch
      %44 = sbr.rel (0) target = $region45
    $region44: #{tpu_custom_call.1} parent=1 // pred_region
      _
    $region45: #{tpu_custom_call.1} parent=1 // pred_fallthru
      _
    // Predicated region
    $region46: #{tpu_custom_call.1} parent=1 // pred_check
      _
    $region47: #{tpu_custom_call.1} parent=1 // pred_check_branch
      %46 = sbr.rel (0) target = $region49
    $region48: #{tpu_custom_call.1} parent=1 // pred_region
      _
    $region49: #{tpu_custom_call.1} parent=1 // pred_fallthru
      _
    // Predicated region
    $region50: #{tpu_custom_call.1} parent=1 // pred_check
      _
    $region51: #{tpu_custom_call.1} parent=1 // pred_check_branch
      %48 = sbr.rel (0) target = $region53
    $region52: #{tpu_custom_call.1} parent=1 // pred_region
      _
    $region53: #{tpu_custom_call.1} parent=1 // pred_fallthru
      _
    // Predicated region
    $region54: #{tpu_custom_call.1} parent=1 // pred_check
      _
    $region55: #{tpu_custom_call.1} parent=1 // pred_check_branch
      %50 = sbr.rel (0) target = $region57
    $region56: #{tpu_custom_call.1} parent=1 // pred_region
      _
    $region57: #{tpu_custom_call.1} parent=1 // pred_fallthru
      _
    // Predicated region
    $region58: #{tpu_custom_call.1} parent=1 // pred_check
      _
    $region59: #{tpu_custom_call.1} parent=1 // pred_check_branch
      %52 = sbr.rel (0) target = $region61
    $region60: #{tpu_custom_call.1} parent=1 // pred_region
      _
    $region61: #{tpu_custom_call.1} parent=1 // pred_fallthru
      _
    // Predicated region
    $region62: #{tpu_custom_call.1} parent=1 // pred_check
      _
    $region63: #{tpu_custom_call.1} parent=1 // pred_check_branch
      %54 = sbr.rel (0) target = $region65
    $region64: #{tpu_custom_call.1} parent=1 // pred_region
      _
    $region65: #{tpu_custom_call.1} parent=1 // pred_fallthru
      _
    // Predicated region
    $region66: #{tpu_custom_call.1} parent=1 // pred_check
      _
    $region67: #{tpu_custom_call.1} parent=1 // pred_check_branch
      %56 = sbr.rel (0) target = $region69
    $region68: #{tpu_custom_call.1} parent=1 // pred_region
      _
    $region69: #{tpu_custom_call.1} parent=1 // pred_fallthru
      _
    %v57 = vld [vmem:[%s0] sm:$0xf]
    %59 = vrot.lane.b32.xlu0 %v57, 16
    %v60 = vpop.permute.xlu0 %59
    %vm62 = vcmask 130048
    %v63 = vsel %vm62, 0.0, %v60
    %v64 = vld [vmem:[%s1] sm:$0xff]
    %s65 = scalar_lea.vmem %s1, 8
    %v66 = vld [vmem:[%s65] sm:$0xff]
    %vm67 = vcmask 31744
    %v69 = vsel %vm67, %v66, 0
    %vm71 = vcmask 1043456
    %v72 = vsel %vm71, %v57, 0
    %74 = vmatprep.subr.mxu0 0.0
    %75 = vmatpush1.msra.mxu0 %v72
    %76 = vmatprep.subr.mxu0 0.0
    %77 = vmatpush1.msra.mxu0 0.0
    %78 = vmatprep.subr.mxu0 0.0
    %79 = vmatpush1.msra.mxu0 0.0
    %80 = vmatprep.subr.mxu0 0.0
    %81 = vmatpush1.msra.mxu0 0.0
    %82 = vmatprep.subr.mxu0 0.0
    %83 = vmatpush1.msra.mxu0 0.0
    %84 = vmatprep.subr.mxu0 0.0
    %85 = vmatpush1.msra.mxu0 0.0
    %86 = vmatprep.subr.mxu0 0.0
    %87 = vmatpush1.msra.mxu0 0.0
    %88 = vmatprep.subr.mxu0 0.0
    %89 = vmatpush1.msra.mxu0 0.0
    %90 = vmatprep.subr.mxu0 0.0
    %91 = vmatpush1.msra.mxu0 0.0
    %92 = vmatprep.subr.mxu0 0.0
    %93 = vmatpush1.msra.mxu0 0.0
    %94 = vmatprep.subr.mxu0 0.0
    %95 = vmatpush1.msra.mxu0 0.0
    %96 = vmatprep.subr.mxu0 0.0
    %97 = vmatpush1.msra.mxu0 0.0
    %98 = vmatprep.subr.mxu0 0.0
    %99 = vmatpush1.msra.mxu0 0.0
    %100 = vmatprep.subr.mxu0 0.0
    %101 = vmatpush1.msra.mxu0 0.0
    %102 = vmatprep.subr.mxu0 0.0
    %103 = vmatpush1.msra.mxu0 0.0
    %104 = vmatprep.subr.mxu0 0.0
    %105 = vmatpush1.msra.mxu0 0.0
    %106 = vmatprep.subr.mxu0 0.0
    %107 = vmatpush1.msra.mxu0 0.0
    %108 = vmatprep.subr.mxu0 0.0
    %109 = vmatpush1.msra.mxu0 0.0
    %110 = vmatprep.subr.mxu0 0.0
    %111 = vmatpush1.msra.mxu0 0.0
    %112 = vmatprep.subr.mxu0 0.0
    %113 = vmatpush1.msra.mxu0 0.0
    %114 = vmatprep.subr.mxu0 0.0
    %115 = vmatpush1.msra.mxu0 0.0
    %116 = vmatprep.subr.mxu0 0.0
    %117 = vmatpush1.msra.mxu0 0.0
    %118 = vmatprep.subr.mxu0 0.0
    %119 = vmatpush1.msra.mxu0 0.0
    %120 = vmatprep.subr.mxu0 0.0
    %121 = vmatpush1.msra.mxu0 0.0
    %122 = vmatprep.subr.mxu0 0.0
    %123 = vmatpush1.msra.mxu0 0.0
    %124 = vmatprep.subr.mxu0 0.0
    %125 = vmatpush1.msra.mxu0 0.0
    %126 = vmatprep.subr.mxu0 0.0
    %127 = vmatpush1.msra.mxu0 0.0
    %128 = vmatprep.subr.mxu0 0.0
    %129 = vmatpush1.msra.mxu0 0.0
    %130 = vmatprep.subr.mxu0 0.0
    %131 = vmatpush1.msra.mxu0 0.0
    %132 = vmatprep.subr.mxu0 0.0
    %133 = vmatpush1.msra.mxu0 0.0
    %134 = vmatprep.subr.mxu0 0.0
    %135 = vmatpush1.msra.mxu0 0.0
    %136 = vmatprep.subr.mxu0 0.0
    %137 = vmatpush1.msra.mxu0 0.0
    %138 = vmatprep.mubr.f32.mxu0 0.0
    %139 = vmatmul.mubr.f32.gmra.mrb[0].mxu0 %v69
    %v140 = vpop.f32.mrb[0].mxu0
    %v141 = vadd.f32 0.0, %v140
    %v142 = vpop.f32.mrb[0].mxu0
    %143 = vdwg.mxu0
    %v145 = vsel %vm67, %v64, 0
    %v148 = vsel %vm71, %v63, 0
    %150 = vmatprep.subr.mxu0 0.0
    %151 = vmatpush1.msra.mxu0 %v148
    %152 = vmatprep.subr.mxu0 0.0
    %153 = vmatpush1.msra.mxu0 0.0
    %154 = vmatprep.subr.mxu0 0.0
    %155 = vmatpush1.msra.mxu0 0.0
    %156 = vmatprep.subr.mxu0 0.0
    %157 = vmatpush1.msra.mxu0 0.0
    %158 = vmatprep.subr.mxu0 0.0
    %159 = vmatpush1.msra.mxu0 0.0
    %160 = vmatprep.subr.mxu0 0.0
    %161 = vmatpush1.msra.mxu0 0.0
    %162 = vmatprep.subr.mxu0 0.0
    %163 = vmatpush1.msra.mxu0 0.0
    %164 = vmatprep.subr.mxu0 0.0
    %165 = vmatpush1.msra.mxu0 0.0
    %166 = vmatprep.subr.mxu0 0.0
    %167 = vmatpush1.msra.mxu0 0.0
    %168 = vmatprep.subr.mxu0 0.0
    %169 = vmatpush1.msra.mxu0 0.0
    %170 = vmatprep.subr.mxu0 0.0
    %171 = vmatpush1.msra.mxu0 0.0
    %172 = vmatprep.subr.mxu0 0.0
    %173 = vmatpush1.msra.mxu0 0.0
    %174 = vmatprep.subr.mxu0 0.0
    %175 = vmatpush1.msra.mxu0 0.0
    %176 = vmatprep.subr.mxu0 0.0
    %177 = vmatpush1.msra.mxu0 0.0
    %178 = vmatprep.subr.mxu0 0.0
    %179 = vmatpush1.msra.mxu0 0.0
    %180 = vmatprep.subr.mxu0 0.0
    %181 = vmatpush1.msra.mxu0 0.0
    %182 = vmatprep.subr.mxu0 0.0
    %183 = vmatpush1.msra.mxu0 0.0
    %184 = vmatprep.subr.mxu0 0.0
    %185 = vmatpush1.msra.mxu0 0.0
    %186 = vmatprep.subr.mxu0 0.0
    %187 = vmatpush1.msra.mxu0 0.0
    %188 = vmatprep.subr.mxu0 0.0
    %189 = vmatpush1.msra.mxu0 0.0
    %190 = vmatprep.subr.mxu0 0.0
    %191 = vmatpush1.msra.mxu0 0.0
    %192 = vmatprep.subr.mxu0 0.0
    %193 = vmatpush1.msra.mxu0 0.0
    %194 = vmatprep.subr.mxu0 0.0
    %195 = vmatpush1.msra.mxu0 0.0
    %196 = vmatprep.subr.mxu0 0.0
    %197 = vmatpush1.msra.mxu0 0.0
    %198 = vmatprep.subr.mxu0 0.0
    %199 = vmatpush1.msra.mxu0 0.0
    %200 = vmatprep.subr.mxu0 0.0
    %201 = vmatpush1.msra.mxu0 0.0
    %202 = vmatprep.subr.mxu0 0.0
    %203 = vmatpush1.msra.mxu0 0.0
    %204 = vmatprep.subr.mxu0 0.0
    %205 = vmatpush1.msra.mxu0 0.0
    %206 = vmatprep.subr.mxu0 0.0
    %207 = vmatpush1.msra.mxu0 0.0
    %208 = vmatprep.subr.mxu0 0.0
    %209 = vmatpush1.msra.mxu0 0.0
    %210 = vmatprep.subr.mxu0 0.0
    %211 = vmatpush1.msra.mxu0 0.0
    %212 = vmatprep.subr.mxu0 0.0
    %213 = vmatpush1.msra.mxu0 0.0
    %214 = vmatprep.mubr.f32.mxu0 0.0
    %215 = vmatmul.mubr.f32.gmra.mrb[0].mxu0 %v145
    %v216 = vpop.f32.mrb[0].mxu0
    %v217 = vadd.f32 %v141, %v216
    %v218 = vpop.f32.mrb[0].mxu0
    %219 = vdwg.mxu0
    %v220 = vld [vmem:[%s2] sm:$0xff]
    %222 = vset.pattern.permute.xlu0 0
    %223 = vperm.xlu0 %222, %v220
    %v224 = vpop.permute.xlu0 %223
    %v226 = vadd.f32 %v217, %v224
    %v227 = vmax.f32 %v226, 0.0
    %v228 = vld [vmem:[%s3] sm:$0xff]
    %v229 = vld [vmem:[%s4] sm:$0xff]
    %231 = vset.pattern.permute.xlu0 0
    %232 = vperm.xlu0 %231, %v229
    %v233 = vpop.permute.xlu0 %232
    %v236 = vsel %vm67, %v228, 0
    %238 = vmatprep.subr.mxu0 0.0
    %239 = vmatpush1.msra.mxu0 %v72
    %240 = vmatprep.subr.mxu0 0.0
    %241 = vmatpush1.msra.mxu0 0.0
    %242 = vmatprep.subr.mxu0 0.0
    %243 = vmatpush1.msra.mxu0 0.0
    %244 = vmatprep.subr.mxu0 0.0
    %245 = vmatpush1.msra.mxu0 0.0
    %246 = vmatprep.subr.mxu0 0.0
    %247 = vmatpush1.msra.mxu0 0.0
    %248 = vmatprep.subr.mxu0 0.0
    %249 = vmatpush1.msra.mxu0 0.0
    %250 = vmatprep.subr.mxu0 0.0
    %251 = vmatpush1.msra.mxu0 0.0
    %252 = vmatprep.subr.mxu0 0.0
    %253 = vmatpush1.msra.mxu0 0.0
    %254 = vmatprep.subr.mxu0 0.0
    %255 = vmatpush1.msra.mxu0 0.0
    %256 = vmatprep.subr.mxu0 0.0
    %257 = vmatpush1.msra.mxu0 0.0
    %258 = vmatprep.subr.mxu0 0.0
    %259 = vmatpush1.msra.mxu0 0.0
    %260 = vmatprep.subr.mxu0 0.0
    %261 = vmatpush1.msra.mxu0 0.0
    %262 = vmatprep.subr.mxu0 0.0
    %263 = vmatpush1.msra.mxu0 0.0
    %264 = vmatprep.subr.mxu0 0.0
    %265 = vmatpush1.msra.mxu0 0.0
    %266 = vmatprep.subr.mxu0 0.0
    %267 = vmatpush1.msra.mxu0 0.0
    %268 = vmatprep.subr.mxu0 0.0
    %269 = vmatpush1.msra.mxu0 0.0
    %270 = vmatprep.subr.mxu0 0.0
    %271 = vmatpush1.msra.mxu0 0.0
    %272 = vmatprep.subr.mxu0 0.0
    %273 = vmatpush1.msra.mxu0 0.0
    %274 = vmatprep.subr.mxu0 0.0
    %275 = vmatpush1.msra.mxu0 0.0
    %276 = vmatprep.subr.mxu0 0.0
    %277 = vmatpush1.msra.mxu0 0.0
    %278 = vmatprep.subr.mxu0 0.0
    %279 = vmatpush1.msra.mxu0 0.0
    %280 = vmatprep.subr.mxu0 0.0
    %281 = vmatpush1.msra.mxu0 0.0
    %282 = vmatprep.subr.mxu0 0.0
    %283 = vmatpush1.msra.mxu0 0.0
    %284 = vmatprep.subr.mxu0 0.0
    %285 = vmatpush1.msra.mxu0 0.0
    %286 = vmatprep.subr.mxu0 0.0
    %287 = vmatpush1.msra.mxu0 0.0
    %288 = vmatprep.subr.mxu0 0.0
    %289 = vmatpush1.msra.mxu0 0.0
    %290 = vmatprep.subr.mxu0 0.0
    %291 = vmatpush1.msra.mxu0 0.0
    %292 = vmatprep.subr.mxu0 0.0
    %293 = vmatpush1.msra.mxu0 0.0
    %294 = vmatprep.subr.mxu0 0.0
    %295 = vmatpush1.msra.mxu0 0.0
    %296 = vmatprep.subr.mxu0 0.0
    %297 = vmatpush1.msra.mxu0 0.0
    %298 = vmatprep.subr.mxu0 0.0
    %299 = vmatpush1.msra.mxu0 0.0
    %300 = vmatprep.subr.mxu0 0.0
    %301 = vmatpush1.msra.mxu0 0.0
    %302 = vmatprep.mubr.f32.mxu0 0.0
    %303 = vmatmul.mubr.f32.gmra.mrb[0].mxu0 %v236
    %v304 = vpop.f32.mrb[0].mxu0
    %v305 = vadd.f32 %v233, %v304
    %v306 = vpop.f32.mrb[0].mxu0
    %307 = vdwg.mxu0
    %v308 = vadd.f32 %v227, %v305
    %v309 = vmax.f32 %v308, 0.0
    %311 = vrot.lane.b32.xlu0 %v309, 32
    %v312 = vpop.permute.xlu0 %311
    %vm314 = vcmask 261120
    %v315 = vsel %vm314, 0.0, %v312
    %v316 = vld [vmem:[%s5] sm:$0xff]
    %s317 = scalar_lea.vmem %s5, 8
    %v318 = vld [vmem:[%s317] sm:$0xff]
    %vm319 = vcmask 64512
    %v321 = vsel %vm319, %v318, 0
    %323 = vmatprep.subr.mxu0 0.0
    %324 = vmatpush1.msra.mxu0 %v309
    %325 = vmatprep.subr.mxu0 0.0
    %326 = vmatpush1.msra.mxu0 0.0
    %327 = vmatprep.subr.mxu0 0.0
    %328 = vmatpush1.msra.mxu0 0.0
    %329 = vmatprep.subr.mxu0 0.0
    %330 = vmatpush1.msra.mxu0 0.0
    %331 = vmatprep.subr.mxu0 0.0
    %332 = vmatpush1.msra.mxu0 0.0
    %333 = vmatprep.subr.mxu0 0.0
    %334 = vmatpush1.msra.mxu0 0.0
    %335 = vmatprep.subr.mxu0 0.0
    %336 = vmatpush1.msra.mxu0 0.0
    %337 = vmatprep.subr.mxu0 0.0
    %338 = vmatpush1.msra.mxu0 0.0
    %339 = vmatprep.subr.mxu0 0.0
    %340 = vmatpush1.msra.mxu0 0.0
    %341 = vmatprep.subr.mxu0 0.0
    %342 = vmatpush1.msra.mxu0 0.0
    %343 = vmatprep.subr.mxu0 0.0
    %344 = vmatpush1.msra.mxu0 0.0
    %345 = vmatprep.subr.mxu0 0.0
    %346 = vmatpush1.msra.mxu0 0.0
    %347 = vmatprep.subr.mxu0 0.0
    %348 = vmatpush1.msra.mxu0 0.0
    %349 = vmatprep.subr.mxu0 0.0
    %350 = vmatpush1.msra.mxu0 0.0
    %351 = vmatprep.subr.mxu0 0.0
    %352 = vmatpush1.msra.mxu0 0.0
    %353 = vmatprep.subr.mxu0 0.0
    %354 = vmatpush1.msra.mxu0 0.0
    %355 = vmatprep.subr.mxu0 0.0
    %356 = vmatpush1.msra.mxu0 0.0
    %357 = vmatprep.subr.mxu0 0.0
    %358 = vmatpush1.msra.mxu0 0.0
    %359 = vmatprep.subr.mxu0 0.0
    %360 = vmatpush1.msra.mxu0 0.0
    %361 = vmatprep.subr.mxu0 0.0
    %362 = vmatpush1.msra.mxu0 0.0
    %363 = vmatprep.subr.mxu0 0.0
    %364 = vmatpush1.msra.mxu0 0.0
    %365 = vmatprep.subr.mxu0 0.0
    %366 = vmatpush1.msra.mxu0 0.0
    %367 = vmatprep.subr.mxu0 0.0
    %368 = vmatpush1.msra.mxu0 0.0
    %369 = vmatprep.subr.mxu0 0.0
    %370 = vmatpush1.msra.mxu0 0.0
    %371 = vmatprep.subr.mxu0 0.0
    %372 = vmatpush1.msra.mxu0 0.0
    %373 = vmatprep.subr.mxu0 0.0
    %374 = vmatpush1.msra.mxu0 0.0
    %375 = vmatprep.subr.mxu0 0.0
    %376 = vmatpush1.msra.mxu0 0.0
    %377 = vmatprep.subr.mxu0 0.0
    %378 = vmatpush1.msra.mxu0 0.0
    %379 = vmatprep.subr.mxu0 0.0
    %380 = vmatpush1.msra.mxu0 0.0
    %381 = vmatprep.subr.mxu0 0.0
    %382 = vmatpush1.msra.mxu0 0.0
    %383 = vmatprep.subr.mxu0 0.0
    %384 = vmatpush1.msra.mxu0 0.0
    %385 = vmatprep.subr.mxu0 0.0
    %386 = vmatpush1.msra.mxu0 0.0
    %387 = vmatprep.mubr.f32.mxu0 0.0
    %388 = vmatmul.mubr.f32.gmra.mrb[0].mxu0 %v321
    %v389 = vpop.f32.mrb[0].mxu0
    %v390 = vadd.f32 0.0, %v389
    %v391 = vpop.f32.mrb[0].mxu0
    %392 = vdwg.mxu0
    %v394 = vsel %vm319, %v316, 0
    %396 = vmatprep.subr.mxu0 0.0
    %397 = vmatpush1.msra.mxu0 %v315
    %398 = vmatprep.subr.mxu0 0.0
    %399 = vmatpush1.msra.mxu0 0.0
    %400 = vmatprep.subr.mxu0 0.0
    %401 = vmatpush1.msra.mxu0 0.0
    %402 = vmatprep.subr.mxu0 0.0
    %403 = vmatpush1.msra.mxu0 0.0
    %404 = vmatprep.subr.mxu0 0.0
    %405 = vmatpush1.msra.mxu0 0.0
    %406 = vmatprep.subr.mxu0 0.0
    %407 = vmatpush1.msra.mxu0 0.0
    %408 = vmatprep.subr.mxu0 0.0
    %409 = vmatpush1.msra.mxu0 0.0
    %410 = vmatprep.subr.mxu0 0.0
    %411 = vmatpush1.msra.mxu0 0.0
    %412 = vmatprep.subr.mxu0 0.0
    %413 = vmatpush1.msra.mxu0 0.0
    %414 = vmatprep.subr.mxu0 0.0
    %415 = vmatpush1.msra.mxu0 0.0
    %416 = vmatprep.subr.mxu0 0.0
    %417 = vmatpush1.msra.mxu0 0.0
    %418 = vmatprep.subr.mxu0 0.0
    %419 = vmatpush1.msra.mxu0 0.0
    %420 = vmatprep.subr.mxu0 0.0
    %421 = vmatpush1.msra.mxu0 0.0
    %422 = vmatprep.subr.mxu0 0.0
    %423 = vmatpush1.msra.mxu0 0.0
    %424 = vmatprep.subr.mxu0 0.0
    %425 = vmatpush1.msra.mxu0 0.0
    %426 = vmatprep.subr.mxu0 0.0
    %427 = vmatpush1.msra.mxu0 0.0
    %428 = vmatprep.subr.mxu0 0.0
    %429 = vmatpush1.msra.mxu0 0.0
    %430 = vmatprep.subr.mxu0 0.0
    %431 = vmatpush1.msra.mxu0 0.0
    %432 = vmatprep.subr.mxu0 0.0
    %433 = vmatpush1.msra.mxu0 0.0
    %434 = vmatprep.subr.mxu0 0.0
    %435 = vmatpush1.msra.mxu0 0.0
    %436 = vmatprep.subr.mxu0 0.0
    %437 = vmatpush1.msra.mxu0 0.0
    %438 = vmatprep.subr.mxu0 0.0
    %439 = vmatpush1.msra.mxu0 0.0
    %440 = vmatprep.subr.mxu0 0.0
    %441 = vmatpush1.msra.mxu0 0.0
    %442 = vmatprep.subr.mxu0 0.0
    %443 = vmatpush1.msra.mxu0 0.0
    %444 = vmatprep.subr.mxu0 0.0
    %445 = vmatpush1.msra.mxu0 0.0
    %446 = vmatprep.subr.mxu0 0.0
    %447 = vmatpush1.msra.mxu0 0.0
    %448 = vmatprep.subr.mxu0 0.0
    %449 = vmatpush1.msra.mxu0 0.0
    %450 = vmatprep.subr.mxu0 0.0
    %451 = vmatpush1.msra.mxu0 0.0
    %452 = vmatprep.subr.mxu0 0.0
    %453 = vmatpush1.msra.mxu0 0.0
    %454 = vmatprep.subr.mxu0 0.0
    %455 = vmatpush1.msra.mxu0 0.0
    %456 = vmatprep.subr.mxu0 0.0
    %457 = vmatpush1.msra.mxu0 0.0
    %458 = vmatprep.subr.mxu0 0.0
    %459 = vmatpush1.msra.mxu0 0.0
    %460 = vmatprep.mubr.f32.mxu0 0.0
    %461 = vmatmul.mubr.f32.gmra.mrb[0].mxu0 %v394
    %v462 = vpop.f32.mrb[0].mxu0
    %v463 = vadd.f32 %v390, %v462
    %v464 = vpop.f32.mrb[0].mxu0
    %465 = vdwg.mxu0
    %v466 = vld [vmem:[%s6] sm:$0xff]
    %468 = vset.pattern.permute.xlu0 0
    %469 = vperm.xlu0 %468, %v466
    %v470 = vpop.permute.xlu0 %469
    %v472 = vadd.f32 %v463, %v470
    %v473 = vmax.f32 %v472, 0.0
    %v474 = vld [vmem:[%s7] sm:$0xff]
    %v475 = vld [vmem:[%s8] sm:$0xff]
    %477 = vset.pattern.permute.xlu0 0
    %478 = vperm.xlu0 %477, %v475
    %v479 = vpop.permute.xlu0 %478
    %v482 = vsel %vm319, %v474, 0
    %484 = vmatprep.subr.mxu0 0.0
    %485 = vmatpush1.msra.mxu0 %v309
    %486 = vmatprep.subr.mxu0 0.0
    %487 = vmatpush1.msra.mxu0 0.0
    %488 = vmatprep.subr.mxu0 0.0
    %489 = vmatpush1.msra.mxu0 0.0
    %490 = vmatprep.subr.mxu0 0.0
    %491 = vmatpush1.msra.mxu0 0.0
    %492 = vmatprep.subr.mxu0 0.0
    %493 = vmatpush1.msra.mxu0 0.0
    %494 = vmatprep.subr.mxu0 0.0
    %495 = vmatpush1.msra.mxu0 0.0
    %496 = vmatprep.subr.mxu0 0.0
    %497 = vmatpush1.msra.mxu0 0.0
    %498 = vmatprep.subr.mxu0 0.0
    %499 = vmatpush1.msra.mxu0 0.0
    %500 = vmatprep.subr.mxu0 0.0
    %501 = vmatpush1.msra.mxu0 0.0
    %502 = vmatprep.subr.mxu0 0.0
    %503 = vmatpush1.msra.mxu0 0.0
    %504 = vmatprep.subr.mxu0 0.0
    %505 = vmatpush1.msra.mxu0 0.0
    %506 = vmatprep.subr.mxu0 0.0
    %507 = vmatpush1.msra.mxu0 0.0
    %508 = vmatprep.subr.mxu0 0.0
    %509 = vmatpush1.msra.mxu0 0.0
    %510 = vmatprep.subr.mxu0 0.0
    %511 = vmatpush1.msra.mxu0 0.0
    %512 = vmatprep.subr.mxu0 0.0
    %513 = vmatpush1.msra.mxu0 0.0
    %514 = vmatprep.subr.mxu0 0.0
    %515 = vmatpush1.msra.mxu0 0.0
    %516 = vmatprep.subr.mxu0 0.0
    %517 = vmatpush1.msra.mxu0 0.0
    %518 = vmatprep.subr.mxu0 0.0
    %519 = vmatpush1.msra.mxu0 0.0
    %520 = vmatprep.subr.mxu0 0.0
    %521 = vmatpush1.msra.mxu0 0.0
    %522 = vmatprep.subr.mxu0 0.0
    %523 = vmatpush1.msra.mxu0 0.0
    %524 = vmatprep.subr.mxu0 0.0
    %525 = vmatpush1.msra.mxu0 0.0
    %526 = vmatprep.subr.mxu0 0.0
    %527 = vmatpush1.msra.mxu0 0.0
    %528 = vmatprep.subr.mxu0 0.0
    %529 = vmatpush1.msra.mxu0 0.0
    %530 = vmatprep.subr.mxu0 0.0
    %531 = vmatpush1.msra.mxu0 0.0
    %532 = vmatprep.subr.mxu0 0.0
    %533 = vmatpush1.msra.mxu0 0.0
    %534 = vmatprep.subr.mxu0 0.0
    %535 = vmatpush1.msra.mxu0 0.0
    %536 = vmatprep.subr.mxu0 0.0
    %537 = vmatpush1.msra.mxu0 0.0
    %538 = vmatprep.subr.mxu0 0.0
    %539 = vmatpush1.msra.mxu0 0.0
    %540 = vmatprep.subr.mxu0 0.0
    %541 = vmatpush1.msra.mxu0 0.0
    %542 = vmatprep.subr.mxu0 0.0
    %543 = vmatpush1.msra.mxu0 0.0
    %544 = vmatprep.subr.mxu0 0.0
    %545 = vmatpush1.msra.mxu0 0.0
    %546 = vmatprep.subr.mxu0 0.0
    %547 = vmatpush1.msra.mxu0 0.0
    %548 = vmatprep.mubr.f32.mxu0 0.0
    %549 = vmatmul.mubr.f32.gmra.mrb[0].mxu0 %v482
    %v550 = vpop.f32.mrb[0].mxu0
    %v551 = vadd.f32 %v479, %v550
    %v552 = vpop.f32.mrb[0].mxu0
    %553 = vdwg.mxu0
    %v554 = vadd.f32 %v473, %v551
    %v555 = vmax.f32 %v554, 0.0
    %v556 = vld [vmem:[%s9] sm:$0xff]
    %v557 = vld [vmem:[%s9 + $0x8] sm:$0xff]
    %s558 = scalar_lea.vmem %s9, 16
    %v559 = vld [vmem:[%s558] sm:$0xff]
    %v560 = vld [vmem:[%s558 + $0x8] sm:$0xff]
    %562 = vrot.lane.b32.xlu0 %v555, 112
    %v563 = vpop.permute.xlu0 %562
    %v566 = vsel %vm319, %v559, 0
    %v569 = vsel %vm319, %v560, 0
    %571 = vmatprep.subr.mxu0 0.0
    %572 = vmatpush1.msra.mxu0 %v563
    %573 = vmatprep.subr.mxu0 0.0
    %574 = vmatpush1.msra.mxu0 0.0
    %575 = vmatprep.subr.mxu0 0.0
    %576 = vmatpush1.msra.mxu0 0.0
    %577 = vmatprep.subr.mxu0 0.0
    %578 = vmatpush1.msra.mxu0 0.0
    %579 = vmatprep.subr.mxu0 0.0
    %580 = vmatpush1.msra.mxu0 0.0
    %581 = vmatprep.subr.mxu0 0.0
    %582 = vmatpush1.msra.mxu0 0.0
    %583 = vmatprep.subr.mxu0 0.0
    %584 = vmatpush1.msra.mxu0 0.0
    %585 = vmatprep.subr.mxu0 0.0
    %586 = vmatpush1.msra.mxu0 0.0
    %587 = vmatprep.subr.mxu0 0.0
    %588 = vmatpush1.msra.mxu0 0.0
    %589 = vmatprep.subr.mxu0 0.0
    %590 = vmatpush1.msra.mxu0 0.0
    %591 = vmatprep.subr.mxu0 0.0
    %592 = vmatpush1.msra.mxu0 0.0
    %593 = vmatprep.subr.mxu0 0.0
    %594 = vmatpush1.msra.mxu0 0.0
    %595 = vmatprep.subr.mxu0 0.0
    %596 = vmatpush1.msra.mxu0 0.0
    %597 = vmatprep.subr.mxu0 0.0
    %598 = vmatpush1.msra.mxu0 0.0
    %599 = vmatprep.subr.mxu0 0.0
    %600 = vmatpush1.msra.mxu0 0.0
    %601 = vmatprep.subr.mxu0 0.0
    %602 = vmatpush1.msra.mxu0 0.0
    %603 = vmatprep.subr.mxu0 0.0
    %604 = vmatpush1.msra.mxu0 0.0
    %605 = vmatprep.subr.mxu0 0.0
    %606 = vmatpush1.msra.mxu0 0.0
    %607 = vmatprep.subr.mxu0 0.0
    %608 = vmatpush1.msra.mxu0 0.0
    %609 = vmatprep.subr.mxu0 0.0
    %610 = vmatpush1.msra.mxu0 0.0
    %611 = vmatprep.subr.mxu0 0.0
    %612 = vmatpush1.msra.mxu0 0.0
    %613 = vmatprep.subr.mxu0 0.0
    %614 = vmatpush1.msra.mxu0 0.0
    %615 = vmatprep.subr.mxu0 0.0
    %616 = vmatpush1.msra.mxu0 0.0
    %617 = vmatprep.subr.mxu0 0.0
    %618 = vmatpush1.msra.mxu0 0.0
    %619 = vmatprep.subr.mxu0 0.0
    %620 = vmatpush1.msra.mxu0 0.0
    %621 = vmatprep.subr.mxu0 0.0
    %622 = vmatpush1.msra.mxu0 0.0
    %623 = vmatprep.subr.mxu0 0.0
    %624 = vmatpush1.msra.mxu0 0.0
    %625 = vmatprep.subr.mxu0 0.0
    %626 = vmatpush1.msra.mxu0 0.0
    %627 = vmatprep.subr.mxu0 0.0
    %628 = vmatpush1.msra.mxu0 0.0
    %629 = vmatprep.subr.mxu0 0.0
    %630 = vmatpush1.msra.mxu0 0.0
    %631 = vmatprep.subr.mxu0 0.0
    %632 = vmatpush1.msra.mxu0 0.0
    %633 = vmatprep.subr.mxu0 0.0
    %634 = vmatpush1.msra.mxu0 0.0
    %635 = vmatprep.mubr.f32.mxu0 0.0
    %636 = vmatmul.mubr.f32.gmra.mrb[0].mxu0 %v566
    %v637 = vpop.f32.mrb[0].mxu0
    %v638 = vadd.f32 0.0, %v637
    %v639 = vpop.f32.mrb[0].mxu0
    %640 = vmatprep.mubr.f32.mxu0 0.0
    %641 = vmatmul.mubr.f32.gmra.mrb[0].mxu0 %v569
    %v642 = vpop.f32.mrb[0].mxu0
    %v643 = vadd.f32 0.0, %v642
    %v644 = vpop.f32.mrb[0].mxu0
    %645 = vdwg.mxu0
    %v647 = vsel %vm319, %v556, 0
    %v650 = vsel %vm319, %v557, 0
    %652 = vmatprep.subr.mxu0 0.0
    %653 = vmatpush1.msra.mxu0 %v555
    %654 = vmatprep.subr.mxu0 0.0
    %655 = vmatpush1.msra.mxu0 0.0
    %656 = vmatprep.subr.mxu0 0.0
    %657 = vmatpush1.msra.mxu0 0.0
    %658 = vmatprep.subr.mxu0 0.0
    %659 = vmatpush1.msra.mxu0 0.0
    %660 = vmatprep.subr.mxu0 0.0
    %661 = vmatpush1.msra.mxu0 0.0
    %662 = vmatprep.subr.mxu0 0.0
    %663 = vmatpush1.msra.mxu0 0.0
    %664 = vmatprep.subr.mxu0 0.0
    %665 = vmatpush1.msra.mxu0 0.0
    %666 = vmatprep.subr.mxu0 0.0
    %667 = vmatpush1.msra.mxu0 0.0
    %668 = vmatprep.subr.mxu0 0.0
    %669 = vmatpush1.msra.mxu0 0.0
    %670 = vmatprep.subr.mxu0 0.0
    %671 = vmatpush1.msra.mxu0 0.0
    %672 = vmatprep.subr.mxu0 0.0
    %673 = vmatpush1.msra.mxu0 0.0
    %674 = vmatprep.subr.mxu0 0.0
    %675 = vmatpush1.msra.mxu0 0.0
    %676 = vmatprep.subr.mxu0 0.0
    %677 = vmatpush1.msra.mxu0 0.0
    %678 = vmatprep.subr.mxu0 0.0
    %679 = vmatpush1.msra.mxu0 0.0
    %680 = vmatprep.subr.mxu0 0.0
    %681 = vmatpush1.msra.mxu0 0.0
    %682 = vmatprep.subr.mxu0 0.0
    %683 = vmatpush1.msra.mxu0 0.0
    %684 = vmatprep.subr.mxu0 0.0
    %685 = vmatpush1.msra.mxu0 0.0
    %686 = vmatprep.subr.mxu0 0.0
    %687 = vmatpush1.msra.mxu0 0.0
    %688 = vmatprep.subr.mxu0 0.0
    %689 = vmatpush1.msra.mxu0 0.0
    %690 = vmatprep.subr.mxu0 0.0
    %691 = vmatpush1.msra.mxu0 0.0
    %692 = vmatprep.subr.mxu0 0.0
    %693 = vmatpush1.msra.mxu0 0.0
    %694 = vmatprep.subr.mxu0 0.0
    %695 = vmatpush1.msra.mxu0 0.0
    %696 = vmatprep.subr.mxu0 0.0
    %697 = vmatpush1.msra.mxu0 0.0
    %698 = vmatprep.subr.mxu0 0.0
    %699 = vmatpush1.msra.mxu0 0.0
    %700 = vmatprep.subr.mxu0 0.0
    %701 = vmatpush1.msra.mxu0 0.0
    %702 = vmatprep.subr.mxu0 0.0
    %703 = vmatpush1.msra.mxu0 0.0
    %704 = vmatprep.subr.mxu0 0.0
    %705 = vmatpush1.msra.mxu0 0.0
    %706 = vmatprep.subr.mxu0 0.0
    %707 = vmatpush1.msra.mxu0 0.0
    %708 = vmatprep.subr.mxu0 0.0
    %709 = vmatpush1.msra.mxu0 0.0
    %710 = vmatprep.subr.mxu0 0.0
    %711 = vmatpush1.msra.mxu0 0.0
    %712 = vmatprep.subr.mxu0 0.0
    %713 = vmatpush1.msra.mxu0 0.0
    %714 = vmatprep.subr.mxu0 0.0
    %715 = vmatpush1.msra.mxu0 0.0
    %716 = vmatprep.mubr.f32.mxu0 0.0
    %717 = vmatmul.mubr.f32.gmra.mrb[0].mxu0 %v647
    %v718 = vpop.f32.mrb[0].mxu0
    %v719 = vadd.f32 %v638, %v718
    %v720 = vpop.f32.mrb[0].mxu0
    %721 = vmatprep.mubr.f32.mxu0 0.0
    %722 = vmatmul.mubr.f32.gmra.mrb[0].mxu0 %v650
    %v723 = vpop.f32.mrb[0].mxu0
    %v724 = vadd.f32 %v643, %v723
    %v725 = vpop.f32.mrb[0].mxu0
    %726 = vdwg.mxu0
    %s727 = scalar_lea.vmem %s9, 32
    %v728 = vld [vmem:[%s727] sm:$0xff]
    %v729 = vld [vmem:[%s727 + $0x8] sm:$0xff]
    %730 = vrot.lane.b32.xlu0 %v555, 96
    %v731 = vpop.permute.xlu0 %730
    %v734 = vsel %vm319, %v728, 0
    %v737 = vsel %vm319, %v729, 0
    %739 = vmatprep.subr.mxu0 0.0
    %740 = vmatpush1.msra.mxu0 %v731
    %741 = vmatprep.subr.mxu0 0.0
    %742 = vmatpush1.msra.mxu0 0.0
    %743 = vmatprep.subr.mxu0 0.0
    %744 = vmatpush1.msra.mxu0 0.0
    %745 = vmatprep.subr.mxu0 0.0
    %746 = vmatpush1.msra.mxu0 0.0
    %747 = vmatprep.subr.mxu0 0.0
    %748 = vmatpush1.msra.mxu0 0.0
    %749 = vmatprep.subr.mxu0 0.0
    %750 = vmatpush1.msra.mxu0 0.0
    %751 = vmatprep.subr.mxu0 0.0
    %752 = vmatpush1.msra.mxu0 0.0
    %753 = vmatprep.subr.mxu0 0.0
    %754 = vmatpush1.msra.mxu0 0.0
    %755 = vmatprep.subr.mxu0 0.0
    %756 = vmatpush1.msra.mxu0 0.0
    %757 = vmatprep.subr.mxu0 0.0
    %758 = vmatpush1.msra.mxu0 0.0
    %759 = vmatprep.subr.mxu0 0.0
    %760 = vmatpush1.msra.mxu0 0.0
    %761 = vmatprep.subr.mxu0 0.0
    %762 = vmatpush1.msra.mxu0 0.0
    %763 = vmatprep.subr.mxu0 0.0
    %764 = vmatpush1.msra.mxu0 0.0
    %765 = vmatprep.subr.mxu0 0.0
    %766 = vmatpush1.msra.mxu0 0.0
    %767 = vmatprep.subr.mxu0 0.0
    %768 = vmatpush1.msra.mxu0 0.0
    %769 = vmatprep.subr.mxu0 0.0
    %770 = vmatpush1.msra.mxu0 0.0
    %771 = vmatprep.subr.mxu0 0.0
    %772 = vmatpush1.msra.mxu0 0.0
    %773 = vmatprep.subr.mxu0 0.0
    %774 = vmatpush1.msra.mxu0 0.0
    %775 = vmatprep.subr.mxu0 0.0
    %776 = vmatpush1.msra.mxu0 0.0
    %777 = vmatprep.subr.mxu0 0.0
    %778 = vmatpush1.msra.mxu0 0.0
    %779 = vmatprep.subr.mxu0 0.0
    %780 = vmatpush1.msra.mxu0 0.0
    %781 = vmatprep.subr.mxu0 0.0
    %782 = vmatpush1.msra.mxu0 0.0
    %783 = vmatprep.subr.mxu0 0.0
    %784 = vmatpush1.msra.mxu0 0.0
    %785 = vmatprep.subr.mxu0 0.0
    %786 = vmatpush1.msra.mxu0 0.0
    %787 = vmatprep.subr.mxu0 0.0
    %788 = vmatpush1.msra.mxu0 0.0
    %789 = vmatprep.subr.mxu0 0.0
    %790 = vmatpush1.msra.mxu0 0.0
    %791 = vmatprep.subr.mxu0 0.0
    %792 = vmatpush1.msra.mxu0 0.0
    %793 = vmatprep.subr.mxu0 0.0
    %794 = vmatpush1.msra.mxu0 0.0
    %795 = vmatprep.subr.mxu0 0.0
    %796 = vmatpush1.msra.mxu0 0.0
    %797 = vmatprep.subr.mxu0 0.0
    %798 = vmatpush1.msra.mxu0 0.0
    %799 = vmatprep.subr.mxu0 0.0
    %800 = vmatpush1.msra.mxu0 0.0
    %801 = vmatprep.subr.mxu0 0.0
    %802 = vmatpush1.msra.mxu0 0.0
    %803 = vmatprep.mubr.f32.mxu0 0.0
    %804 = vmatmul.mubr.f32.gmra.mrb[0].mxu0 %v734
    %v805 = vpop.f32.mrb[0].mxu0
    %v806 = vadd.f32 0.0, %v805
    %v807 = vpop.f32.mrb[0].mxu0
    %808 = vmatprep.mubr.f32.mxu0 0.0
    %809 = vmatmul.mubr.f32.gmra.mrb[0].mxu0 %v737
    %v810 = vpop.f32.mrb[0].mxu0
    %v811 = vadd.f32 0.0, %v810
    %v812 = vpop.f32.mrb[0].mxu0
    %813 = vdwg.mxu0
    %v814 = vadd.f32 %v719, %v806
    %v815 = vadd.f32 %v724, %v811
    %s816 = scalar_lea.vmem %s9, 48
    %v817 = vld [vmem:[%s816] sm:$0xff]
    %v818 = vld [vmem:[%s816 + $0x8] sm:$0xff]
    %819 = vrot.lane.b32.xlu0 %v555, 80
    %v820 = vpop.permute.xlu0 %819
    %v823 = vsel %vm319, %v817, 0
    %v826 = vsel %vm319, %v818, 0
    %828 = vmatprep.subr.mxu0 0.0
    %829 = vmatpush1.msra.mxu0 %v820
    %830 = vmatprep.subr.mxu0 0.0
    %831 = vmatpush1.msra.mxu0 0.0
    %832 = vmatprep.subr.mxu0 0.0
    %833 = vmatpush1.msra.mxu0 0.0
    %834 = vmatprep.subr.mxu0 0.0
    %835 = vmatpush1.msra.mxu0 0.0
    %836 = vmatprep.subr.mxu0 0.0
    %837 = vmatpush1.msra.mxu0 0.0
    %838 = vmatprep.subr.mxu0 0.0
    %839 = vmatpush1.msra.mxu0 0.0
    %840 = vmatprep.subr.mxu0 0.0
    %841 = vmatpush1.msra.mxu0 0.0
    %842 = vmatprep.subr.mxu0 0.0
    %843 = vmatpush1.msra.mxu0 0.0
    %844 = vmatprep.subr.mxu0 0.0
    %845 = vmatpush1.msra.mxu0 0.0
    %846 = vmatprep.subr.mxu0 0.0
    %847 = vmatpush1.msra.mxu0 0.0
    %848 = vmatprep.subr.mxu0 0.0
    %849 = vmatpush1.msra.mxu0 0.0
    %850 = vmatprep.subr.mxu0 0.0
    %851 = vmatpush1.msra.mxu0 0.0
    %852 = vmatprep.subr.mxu0 0.0
    %853 = vmatpush1.msra.mxu0 0.0
    %854 = vmatprep.subr.mxu0 0.0
    %855 = vmatpush1.msra.mxu0 0.0
    %856 = vmatprep.subr.mxu0 0.0
    %857 = vmatpush1.msra.mxu0 0.0
    %858 = vmatprep.subr.mxu0 0.0
    %859 = vmatpush1.msra.mxu0 0.0
    %860 = vmatprep.subr.mxu0 0.0
    %861 = vmatpush1.msra.mxu0 0.0
    %862 = vmatprep.subr.mxu0 0.0
    %863 = vmatpush1.msra.mxu0 0.0
    %864 = vmatprep.subr.mxu0 0.0
    %865 = vmatpush1.msra.mxu0 0.0
    %866 = vmatprep.subr.mxu0 0.0
    %867 = vmatpush1.msra.mxu0 0.0
    %868 = vmatprep.subr.mxu0 0.0
    %869 = vmatpush1.msra.mxu0 0.0
    %870 = vmatprep.subr.mxu0 0.0
    %871 = vmatpush1.msra.mxu0 0.0
    %872 = vmatprep.subr.mxu0 0.0
    %873 = vmatpush1.msra.mxu0 0.0
    %874 = vmatprep.subr.mxu0 0.0
    %875 = vmatpush1.msra.mxu0 0.0
    %876 = vmatprep.subr.mxu0 0.0
    %877 = vmatpush1.msra.mxu0 0.0
    %878 = vmatprep.subr.mxu0 0.0
    %879 = vmatpush1.msra.mxu0 0.0
    %880 = vmatprep.subr.mxu0 0.0
    %881 = vmatpush1.msra.mxu0 0.0
    %882 = vmatprep.subr.mxu0 0.0
    %883 = vmatpush1.msra.mxu0 0.0
    %884 = vmatprep.subr.mxu0 0.0
    %885 = vmatpush1.msra.mxu0 0.0
    %886 = vmatprep.subr.mxu0 0.0
    %887 = vmatpush1.msra.mxu0 0.0
    %888 = vmatprep.subr.mxu0 0.0
    %889 = vmatpush1.msra.mxu0 0.0
    %890 = vmatprep.subr.mxu0 0.0
    %891 = vmatpush1.msra.mxu0 0.0
    %892 = vmatprep.mubr.f32.mxu0 0.0
    %893 = vmatmul.mubr.f32.gmra.mrb[0].mxu0 %v823
    %v894 = vpop.f32.mrb[0].mxu0
    %v895 = vadd.f32 0.0, %v894
    %v896 = vpop.f32.mrb[0].mxu0
    %897 = vmatprep.mubr.f32.mxu0 0.0
    %898 = vmatmul.mubr.f32.gmra.mrb[0].mxu0 %v826
    %v899 = vpop.f32.mrb[0].mxu0
    %v900 = vadd.f32 0.0, %v899
    %v901 = vpop.f32.mrb[0].mxu0
    %902 = vdwg.mxu0
    %v903 = vadd.f32 %v814, %v895
    %v904 = vadd.f32 %v815, %v900
    %s905 = scalar_lea.vmem %s9, 64
    %v906 = vld [vmem:[%s905] sm:$0xff]
    %v907 = vld [vmem:[%s905 + $0x8] sm:$0xff]
    %908 = vrot.lane.b32.xlu0 %v555, 64
    %v909 = vpop.permute.xlu0 %908
    %v912 = vsel %vm319, %v906, 0
    %v915 = vsel %vm319, %v907, 0
    %917 = vmatprep.subr.mxu0 0.0
    %918 = vmatpush1.msra.mxu0 %v909
    %919 = vmatprep.subr.mxu0 0.0
    %920 = vmatpush1.msra.mxu0 0.0
    %921 = vmatprep.subr.mxu0 0.0
    %922 = vmatpush1.msra.mxu0 0.0
    %923 = vmatprep.subr.mxu0 0.0
    %924 = vmatpush1.msra.mxu0 0.0
    %925 = vmatprep.subr.mxu0 0.0
    %926 = vmatpush1.msra.mxu0 0.0
    %927 = vmatprep.subr.mxu0 0.0
    %928 = vmatpush1.msra.mxu0 0.0
    %929 = vmatprep.subr.mxu0 0.0
    %930 = vmatpush1.msra.mxu0 0.0
    %931 = vmatprep.subr.mxu0 0.0
    %932 = vmatpush1.msra.mxu0 0.0
    %933 = vmatprep.subr.mxu0 0.0
    %934 = vmatpush1.msra.mxu0 0.0
    %935 = vmatprep.subr.mxu0 0.0
    %936 = vmatpush1.msra.mxu0 0.0
    %937 = vmatprep.subr.mxu0 0.0
    %938 = vmatpush1.msra.mxu0 0.0
    %939 = vmatprep.subr.mxu0 0.0
    %940 = vmatpush1.msra.mxu0 0.0
    %941 = vmatprep.subr.mxu0 0.0
    %942 = vmatpush1.msra.mxu0 0.0
    %943 = vmatprep.subr.mxu0 0.0
    %944 = vmatpush1.msra.mxu0 0.0
    %945 = vmatprep.subr.mxu0 0.0
    %946 = vmatpush1.msra.mxu0 0.0
    %947 = vmatprep.subr.mxu0 0.0
    %948 = vmatpush1.msra.mxu0 0.0
    %949 = vmatprep.subr.mxu0 0.0
    %950 = vmatpush1.msra.mxu0 0.0
    %951 = vmatprep.subr.mxu0 0.0
    %952 = vmatpush1.msra.mxu0 0.0
    %953 = vmatprep.subr.mxu0 0.0
    %954 = vmatpush1.msra.mxu0 0.0
    %955 = vmatprep.subr.mxu0 0.0
    %956 = vmatpush1.msra.mxu0 0.0
    %957 = vmatprep.subr.mxu0 0.0
    %958 = vmatpush1.msra.mxu0 0.0
    %959 = vmatprep.subr.mxu0 0.0
    %960 = vmatpush1.msra.mxu0 0.0
    %961 = vmatprep.subr.mxu0 0.0
    %962 = vmatpush1.msra.mxu0 0.0
    %963 = vmatprep.subr.mxu0 0.0
    %964 = vmatpush1.msra.mxu0 0.0
    %965 = vmatprep.subr.mxu0 0.0
    %966 = vmatpush1.msra.mxu0 0.0
    %967 = vmatprep.subr.mxu0 0.0
    %968 = vmatpush1.msra.mxu0 0.0
    %969 = vmatprep.subr.mxu0 0.0
    %970 = vmatpush1.msra.mxu0 0.0
    %971 = vmatprep.subr.mxu0 0.0
    %972 = vmatpush1.msra.mxu0 0.0
    %973 = vmatprep.subr.mxu0 0.0
    %974 = vmatpush1.msra.mxu0 0.0
    %975 = vmatprep.subr.mxu0 0.0
    %976 = vmatpush1.msra.mxu0 0.0
    %977 = vmatprep.subr.mxu0 0.0
    %978 = vmatpush1.msra.mxu0 0.0
    %979 = vmatprep.subr.mxu0 0.0
    %980 = vmatpush1.msra.mxu0 0.0
    %981 = vmatprep.mubr.f32.mxu0 0.0
    %982 = vmatmul.mubr.f32.gmra.mrb[0].mxu0 %v912
    %v983 = vpop.f32.mrb[0].mxu0
    %v984 = vadd.f32 0.0, %v983
    %v985 = vpop.f32.mrb[0].mxu0
    %986 = vmatprep.mubr.f32.mxu0 0.0
    %987 = vmatmul.mubr.f32.gmra.mrb[0].mxu0 %v915
    %v988 = vpop.f32.mrb[0].mxu0
    %v989 = vadd.f32 0.0, %v988
    %v990 = vpop.f32.mrb[0].mxu0
    %991 = vdwg.mxu0
    %v992 = vadd.f32 %v903, %v984
    %v993 = vadd.f32 %v904, %v989
    %s994 = scalar_lea.vmem %s9, 80
    %v995 = vld [vmem:[%s994] sm:$0xff]
    %v996 = vld [vmem:[%s994 + $0x8] sm:$0xff]
    %997 = vrot.lane.b32.xlu0 %v555, 48
    %v998 = vpop.permute.xlu0 %997
    %v1001 = vsel %vm319, %v995, 0
    %v1004 = vsel %vm319, %v996, 0
    %1006 = vmatprep.subr.mxu0 0.0
    %1007 = vmatpush1.msra.mxu0 %v998
    %1008 = vmatprep.subr.mxu0 0.0
    %1009 = vmatpush1.msra.mxu0 0.0
    %1010 = vmatprep.subr.mxu0 0.0
    %1011 = vmatpush1.msra.mxu0 0.0
    %1012 = vmatprep.subr.mxu0 0.0
    %1013 = vmatpush1.msra.mxu0 0.0
    %1014 = vmatprep.subr.mxu0 0.0
    %1015 = vmatpush1.msra.mxu0 0.0
    %1016 = vmatprep.subr.mxu0 0.0
    %1017 = vmatpush1.msra.mxu0 0.0
    %1018 = vmatprep.subr.mxu0 0.0
    %1019 = vmatpush1.msra.mxu0 0.0
    %1020 = vmatprep.subr.mxu0 0.0
    %1021 = vmatpush1.msra.mxu0 0.0
    %1022 = vmatprep.subr.mxu0 0.0
    %1023 = vmatpush1.msra.mxu0 0.0
    %1024 = vmatprep.subr.mxu0 0.0
    %1025 = vmatpush1.msra.mxu0 0.0
    %1026 = vmatprep.subr.mxu0 0.0
    %1027 = vmatpush1.msra.mxu0 0.0
    %1028 = vmatprep.subr.mxu0 0.0
    %1029 = vmatpush1.msra.mxu0 0.0
    %1030 = vmatprep.subr.mxu0 0.0
    %1031 = vmatpush1.msra.mxu0 0.0
    %1032 = vmatprep.subr.mxu0 0.0
    %1033 = vmatpush1.msra.mxu0 0.0
    %1034 = vmatprep.subr.mxu0 0.0
    %1035 = vmatpush1.msra.mxu0 0.0
    %1036 = vmatprep.subr.mxu0 0.0
    %1037 = vmatpush1.msra.mxu0 0.0
    %1038 = vmatprep.subr.mxu0 0.0
    %1039 = vmatpush1.msra.mxu0 0.0
    %1040 = vmatprep.subr.mxu0 0.0
    %1041 = vmatpush1.msra.mxu0 0.0
    %1042 = vmatprep.subr.mxu0 0.0
    %1043 = vmatpush1.msra.mxu0 0.0
    %1044 = vmatprep.subr.mxu0 0.0
    %1045 = vmatpush1.msra.mxu0 0.0
    %1046 = vmatprep.subr.mxu0 0.0
    %1047 = vmatpush1.msra.mxu0 0.0
    %1048 = vmatprep.subr.mxu0 0.0
    %1049 = vmatpush1.msra.mxu0 0.0
    %1050 = vmatprep.subr.mxu0 0.0
    %1051 = vmatpush1.msra.mxu0 0.0
    %1052 = vmatprep.subr.mxu0 0.0
    %1053 = vmatpush1.msra.mxu0 0.0
    %1054 = vmatprep.subr.mxu0 0.0
    %1055 = vmatpush1.msra.mxu0 0.0
    %1056 = vmatprep.subr.mxu0 0.0
    %1057 = vmatpush1.msra.mxu0 0.0
    %1058 = vmatprep.subr.mxu0 0.0
    %1059 = vmatpush1.msra.mxu0 0.0
    %1060 = vmatprep.subr.mxu0 0.0
    %1061 = vmatpush1.msra.mxu0 0.0
    %1062 = vmatprep.subr.mxu0 0.0
    %1063 = vmatpush1.msra.mxu0 0.0
    %1064 = vmatprep.subr.mxu0 0.0
    %1065 = vmatpush1.msra.mxu0 0.0
    %1066 = vmatprep.subr.mxu0 0.0
    %1067 = vmatpush1.msra.mxu0 0.0
    %1068 = vmatprep.subr.mxu0 0.0
    %1069 = vmatpush1.msra.mxu0 0.0
    %1070 = vmatprep.mubr.f32.mxu0 0.0
    %1071 = vmatmul.mubr.f32.gmra.mrb[0].mxu0 %v1001
    %v1072 = vpop.f32.mrb[0].mxu0
    %v1073 = vadd.f32 0.0, %v1072
    %v1074 = vpop.f32.mrb[0].mxu0
    %1075 = vmatprep.mubr.f32.mxu0 0.0
    %1076 = vmatmul.mubr.f32.gmra.mrb[0].mxu0 %v1004
    %v1077 = vpop.f32.mrb[0].mxu0
    %v1078 = vadd.f32 0.0, %v1077
    %v1079 = vpop.f32.mrb[0].mxu0
    %1080 = vdwg.mxu0
    %v1081 = vadd.f32 %v992, %v1073
    %v1082 = vadd.f32 %v993, %v1078
    %s1083 = scalar_lea.vmem %s9, 96
    %v1084 = vld [vmem:[%s1083] sm:$0xff]
    %v1085 = vld [vmem:[%s1083 + $0x8] sm:$0xff]
    %1086 = vrot.lane.b32.xlu0 %v555, 32
    %v1087 = vpop.permute.xlu0 %1086
    %v1090 = vsel %vm319, %v1084, 0
    %v1093 = vsel %vm319, %v1085, 0
    %1095 = vmatprep.subr.mxu0 0.0
    %1096 = vmatpush1.msra.mxu0 %v1087
    %1097 = vmatprep.subr.mxu0 0.0
    %1098 = vmatpush1.msra.mxu0 0.0
    %1099 = vmatprep.subr.mxu0 0.0
    %1100 = vmatpush1.msra.mxu0 0.0
    %1101 = vmatprep.subr.mxu0 0.0
    %1102 = vmatpush1.msra.mxu0 0.0
    %1103 = vmatprep.subr.mxu0 0.0
    %1104 = vmatpush1.msra.mxu0 0.0
    %1105 = vmatprep.subr.mxu0 0.0
    %1106 = vmatpush1.msra.mxu0 0.0
    %1107 = vmatprep.subr.mxu0 0.0
    %1108 = vmatpush1.msra.mxu0 0.0
    %1109 = vmatprep.subr.mxu0 0.0
    %1110 = vmatpush1.msra.mxu0 0.0
    %1111 = vmatprep.subr.mxu0 0.0
    %1112 = vmatpush1.msra.mxu0 0.0
    %1113 = vmatprep.subr.mxu0 0.0
    %1114 = vmatpush1.msra.mxu0 0.0
    %1115 = vmatprep.subr.mxu0 0.0
    %1116 = vmatpush1.msra.mxu0 0.0
    %1117 = vmatprep.subr.mxu0 0.0
    %1118 = vmatpush1.msra.mxu0 0.0
    %1119 = vmatprep.subr.mxu0 0.0
    %1120 = vmatpush1.msra.mxu0 0.0
    %1121 = vmatprep.subr.mxu0 0.0
    %1122 = vmatpush1.msra.mxu0 0.0
    %1123 = vmatprep.subr.mxu0 0.0
    %1124 = vmatpush1.msra.mxu0 0.0
    %1125 = vmatprep.subr.mxu0 0.0
    %1126 = vmatpush1.msra.mxu0 0.0
    %1127 = vmatprep.subr.mxu0 0.0
    %1128 = vmatpush1.msra.mxu0 0.0
    %1129 = vmatprep.subr.mxu0 0.0
    %1130 = vmatpush1.msra.mxu0 0.0
    %1131 = vmatprep.subr.mxu0 0.0
    %1132 = vmatpush1.msra.mxu0 0.0
    %1133 = vmatprep.subr.mxu0 0.0
    %1134 = vmatpush1.msra.mxu0 0.0
    %1135 = vmatprep.subr.mxu0 0.0
    %1136 = vmatpush1.msra.mxu0 0.0
    %1137 = vmatprep.subr.mxu0 0.0
    %1138 = vmatpush1.msra.mxu0 0.0
    %1139 = vmatprep.subr.mxu0 0.0
    %1140 = vmatpush1.msra.mxu0 0.0
    %1141 = vmatprep.subr.mxu0 0.0
    %1142 = vmatpush1.msra.mxu0 0.0
    %1143 = vmatprep.subr.mxu0 0.0
    %1144 = vmatpush1.msra.mxu0 0.0
    %1145 = vmatprep.subr.mxu0 0.0
    %1146 = vmatpush1.msra.mxu0 0.0
    %1147 = vmatprep.subr.mxu0 0.0
    %1148 = vmatpush1.msra.mxu0 0.0
    %1149 = vmatprep.subr.mxu0 0.0
    %1150 = vmatpush1.msra.mxu0 0.0
    %1151 = vmatprep.subr.mxu0 0.0
    %1152 = vmatpush1.msra.mxu0 0.0
    %1153 = vmatprep.subr.mxu0 0.0
    %1154 = vmatpush1.msra.mxu0 0.0
    %1155 = vmatprep.subr.mxu0 0.0
    %1156 = vmatpush1.msra.mxu0 0.0
    %1157 = vmatprep.subr.mxu0 0.0
    %1158 = vmatpush1.msra.mxu0 0.0
    %1159 = vmatprep.mubr.f32.mxu0 0.0
    %1160 = vmatmul.mubr.f32.gmra.mrb[0].mxu0 %v1090
    %v1161 = vpop.f32.mrb[0].mxu0
    %v1162 = vadd.f32 0.0, %v1161
    %v1163 = vpop.f32.mrb[0].mxu0
    %1164 = vmatprep.mubr.f32.mxu0 0.0
    %1165 = vmatmul.mubr.f32.gmra.mrb[0].mxu0 %v1093
    %v1166 = vpop.f32.mrb[0].mxu0
    %v1167 = vadd.f32 0.0, %v1166
    %v1168 = vpop.f32.mrb[0].mxu0
    %1169 = vdwg.mxu0
    %v1170 = vadd.f32 %v1081, %v1162
    %v1171 = vadd.f32 %v1082, %v1167
    %s1172 = scalar_lea.vmem %s9, 112
    %v1173 = vld [vmem:[%s1172] sm:$0xff]
    %v1174 = vld [vmem:[%s1172 + $0x8] sm:$0xff]
    %1175 = vrot.lane.b32.xlu0 %v555, 16
    %v1176 = vpop.permute.xlu0 %1175
    %v1179 = vsel %vm319, %v1173, 0
    %v1182 = vsel %vm319, %v1174, 0
    %1184 = vmatprep.subr.mxu0 0.0
    %1185 = vmatpush1.msra.mxu0 %v1176
    %1186 = vmatprep.subr.mxu0 0.0
    %1187 = vmatpush1.msra.mxu0 0.0
    %1188 = vmatprep.subr.mxu0 0.0
    %1189 = vmatpush1.msra.mxu0 0.0
    %1190 = vmatprep.subr.mxu0 0.0
    %1191 = vmatpush1.msra.mxu0 0.0
    %1192 = vmatprep.subr.mxu0 0.0
    %1193 = vmatpush1.msra.mxu0 0.0
    %1194 = vmatprep.subr.mxu0 0.0
    %1195 = vmatpush1.msra.mxu0 0.0
    %1196 = vmatprep.subr.mxu0 0.0
    %1197 = vmatpush1.msra.mxu0 0.0
    %1198 = vmatprep.subr.mxu0 0.0
    %1199 = vmatpush1.msra.mxu0 0.0
    %1200 = vmatprep.subr.mxu0 0.0
    %1201 = vmatpush1.msra.mxu0 0.0
    %1202 = vmatprep.subr.mxu0 0.0
    %1203 = vmatpush1.msra.mxu0 0.0
    %1204 = vmatprep.subr.mxu0 0.0
    %1205 = vmatpush1.msra.mxu0 0.0
    %1206 = vmatprep.subr.mxu0 0.0
    %1207 = vmatpush1.msra.mxu0 0.0
    %1208 = vmatprep.subr.mxu0 0.0
    %1209 = vmatpush1.msra.mxu0 0.0
    %1210 = vmatprep.subr.mxu0 0.0
    %1211 = vmatpush1.msra.mxu0 0.0
    %1212 = vmatprep.subr.mxu0 0.0
    %1213 = vmatpush1.msra.mxu0 0.0
    %1214 = vmatprep.subr.mxu0 0.0
    %1215 = vmatpush1.msra.mxu0 0.0
    %1216 = vmatprep.subr.mxu0 0.0
    %1217 = vmatpush1.msra.mxu0 0.0
    %1218 = vmatprep.subr.mxu0 0.0
    %1219 = vmatpush1.msra.mxu0 0.0
    %1220 = vmatprep.subr.mxu0 0.0
    %1221 = vmatpush1.msra.mxu0 0.0
    %1222 = vmatprep.subr.mxu0 0.0
    %1223 = vmatpush1.msra.mxu0 0.0
    %1224 = vmatprep.subr.mxu0 0.0
    %1225 = vmatpush1.msra.mxu0 0.0
    %1226 = vmatprep.subr.mxu0 0.0
    %1227 = vmatpush1.msra.mxu0 0.0
    %1228 = vmatprep.subr.mxu0 0.0
    %1229 = vmatpush1.msra.mxu0 0.0
    %1230 = vmatprep.subr.mxu0 0.0
    %1231 = vmatpush1.msra.mxu0 0.0
    %1232 = vmatprep.subr.mxu0 0.0
    %1233 = vmatpush1.msra.mxu0 0.0
    %1234 = vmatprep.subr.mxu0 0.0
    %1235 = vmatpush1.msra.mxu0 0.0
    %1236 = vmatprep.subr.mxu0 0.0
    %1237 = vmatpush1.msra.mxu0 0.0
    %1238 = vmatprep.subr.mxu0 0.0
    %1239 = vmatpush1.msra.mxu0 0.0
    %1240 = vmatprep.subr.mxu0 0.0
    %1241 = vmatpush1.msra.mxu0 0.0
    %1242 = vmatprep.subr.mxu0 0.0
    %1243 = vmatpush1.msra.mxu0 0.0
    %1244 = vmatprep.subr.mxu0 0.0
    %1245 = vmatpush1.msra.mxu0 0.0
    %1246 = vmatprep.subr.mxu0 0.0
    %1247 = vmatpush1.msra.mxu0 0.0
    %1248 = vmatprep.mubr.f32.mxu0 0.0
    %1249 = vmatmul.mubr.f32.gmra.mrb[0].mxu0 %v1179
    %v1250 = vpop.f32.mrb[0].mxu0
    %v1251 = vadd.f32 0.0, %v1250
    %v1252 = vpop.f32.mrb[0].mxu0
    %1253 = vmatprep.mubr.f32.mxu0 0.0
    %1254 = vmatmul.mubr.f32.gmra.mrb[0].mxu0 %v1182
    %v1255 = vpop.f32.mrb[0].mxu0
    %v1256 = vadd.f32 0.0, %v1255
    %v1257 = vpop.f32.mrb[0].mxu0
    %1258 = vdwg.mxu0
    %v1259 = vadd.f32 %v1170, %v1251
    %v1260 = vadd.f32 %v1171, %v1256
    %v1261 = vld [vmem:[%s10] sm:$0xff]
    %v1262 = vld [vmem:[%s10 + $0x8] sm:$0xff]
    %1264 = vset.pattern.permute.xlu0 0
    %1265 = vperm.xlu0 %1264, %v1261
    %v1266 = vpop.permute.xlu0 %1265
    %1269 = vset.pattern.permute.xlu0 0
    %1270 = vperm.xlu0 %1269, %v1262
    %v1271 = vpop.permute.xlu0 %1270
    %v1273 = vadd.f32 %v1259, %v1266
    %v1274 = vadd.f32 %v1260, %v1271
    %v1275 = vld [vmem:[%s11] sm:$0xff]
    %v1276 = vld [vmem:[%s12] sm:$0xff]
    %1278 = vset.pattern.permute.xlu0 0
    %1279 = vperm.xlu0 %1278, %v1276
    %v1280 = vpop.permute.xlu0 %1279
    %v1283 = vsel %vm62, %v1275, 0
    %1285 = vmatprep.subr.mxu0 0.0
    %1286 = vmatpush1.msra.mxu0 %v1273
    %1287 = vmatprep.subr.mxu0 0.0
    %1288 = vmatpush1.msra.mxu0 %v1274
    %1289 = vmatprep.subr.mxu0 0.0
    %1290 = vmatpush1.msra.mxu0 0.0
    %1291 = vmatprep.subr.mxu0 0.0
    %1292 = vmatpush1.msra.mxu0 0.0
    %1293 = vmatprep.subr.mxu0 0.0
    %1294 = vmatpush1.msra.mxu0 0.0
    %1295 = vmatprep.subr.mxu0 0.0
    %1296 = vmatpush1.msra.mxu0 0.0
    %1297 = vmatprep.subr.mxu0 0.0
    %1298 = vmatpush1.msra.mxu0 0.0
    %1299 = vmatprep.subr.mxu0 0.0
    %1300 = vmatpush1.msra.mxu0 0.0
    %1301 = vmatprep.subr.mxu0 0.0
    %1302 = vmatpush1.msra.mxu0 0.0
    %1303 = vmatprep.subr.mxu0 0.0
    %1304 = vmatpush1.msra.mxu0 0.0
    %1305 = vmatprep.subr.mxu0 0.0
    %1306 = vmatpush1.msra.mxu0 0.0
    %1307 = vmatprep.subr.mxu0 0.0
    %1308 = vmatpush1.msra.mxu0 0.0
    %1309 = vmatprep.subr.mxu0 0.0
    %1310 = vmatpush1.msra.mxu0 0.0
    %1311 = vmatprep.subr.mxu0 0.0
    %1312 = vmatpush1.msra.mxu0 0.0
    %1313 = vmatprep.subr.mxu0 0.0
    %1314 = vmatpush1.msra.mxu0 0.0
    %1315 = vmatprep.subr.mxu0 0.0
    %1316 = vmatpush1.msra.mxu0 0.0
    %1317 = vmatprep.subr.mxu0 0.0
    %1318 = vmatpush1.msra.mxu0 0.0
    %1319 = vmatprep.subr.mxu0 0.0
    %1320 = vmatpush1.msra.mxu0 0.0
    %1321 = vmatprep.subr.mxu0 0.0
    %1322 = vmatpush1.msra.mxu0 0.0
    %1323 = vmatprep.subr.mxu0 0.0
    %1324 = vmatpush1.msra.mxu0 0.0
    %1325 = vmatprep.subr.mxu0 0.0
    %1326 = vmatpush1.msra.mxu0 0.0
    %1327 = vmatprep.subr.mxu0 0.0
    %1328 = vmatpush1.msra.mxu0 0.0
    %1329 = vmatprep.subr.mxu0 0.0
    %1330 = vmatpush1.msra.mxu0 0.0
    %1331 = vmatprep.subr.mxu0 0.0
    %1332 = vmatpush1.msra.mxu0 0.0
    %1333 = vmatprep.subr.mxu0 0.0
    %1334 = vmatpush1.msra.mxu0 0.0
    %1335 = vmatprep.subr.mxu0 0.0
    %1336 = vmatpush1.msra.mxu0 0.0
    %1337 = vmatprep.subr.mxu0 0.0
    %1338 = vmatpush1.msra.mxu0 0.0
    %1339 = vmatprep.subr.mxu0 0.0
    %1340 = vmatpush1.msra.mxu0 0.0
    %1341 = vmatprep.subr.mxu0 0.0
    %1342 = vmatpush1.msra.mxu0 0.0
    %1343 = vmatprep.subr.mxu0 0.0
    %1344 = vmatpush1.msra.mxu0 0.0
    %1345 = vmatprep.subr.mxu0 0.0
    %1346 = vmatpush1.msra.mxu0 0.0
    %1347 = vmatprep.subr.mxu0 0.0
    %1348 = vmatpush1.msra.mxu0 0.0
    %1349 = vmatprep.mubr.f32.mxu0 0.0
    %1350 = vmatmul.mubr.f32.gmra.mrb[0].mxu0 %v1283
    %v1351 = vpop.f32.mrb[0].mxu0
    %v1352 = vadd.f32 %v1280, %v1351
    %v1353 = vpop.f32.mrb[0].mxu0
    %1354 = vdwg.mxu0
    %v1355 = vld [vmem:[%s13] sm:$0xff]
    %v1356 = vld [vmem:[%s13 + $0x8] sm:$0xff]
    %v1358 = vsel %vm62, %v1355, 0
    %v1361 = vsel %vm62, %v1356, 0
    %1363 = vmatprep.subr.mxu0 0.0
    %1364 = vmatpush1.msra.mxu0 %v1273
    %1365 = vmatprep.subr.mxu0 0.0
    %1366 = vmatpush1.msra.mxu0 %v1274
    %1367 = vmatprep.subr.mxu0 0.0
    %1368 = vmatpush1.msra.mxu0 0.0
    %1369 = vmatprep.subr.mxu0 0.0
    %1370 = vmatpush1.msra.mxu0 0.0
    %1371 = vmatprep.subr.mxu0 0.0
    %1372 = vmatpush1.msra.mxu0 0.0
    %1373 = vmatprep.subr.mxu0 0.0
    %1374 = vmatpush1.msra.mxu0 0.0
    %1375 = vmatprep.subr.mxu0 0.0
    %1376 = vmatpush1.msra.mxu0 0.0
    %1377 = vmatprep.subr.mxu0 0.0
    %1378 = vmatpush1.msra.mxu0 0.0
    %1379 = vmatprep.subr.mxu0 0.0
    %1380 = vmatpush1.msra.mxu0 0.0
    %1381 = vmatprep.subr.mxu0 0.0
    %1382 = vmatpush1.msra.mxu0 0.0
    %1383 = vmatprep.subr.mxu0 0.0
    %1384 = vmatpush1.msra.mxu0 0.0
    %1385 = vmatprep.subr.mxu0 0.0
    %1386 = vmatpush1.msra.mxu0 0.0
    %1387 = vmatprep.subr.mxu0 0.0
    %1388 = vmatpush1.msra.mxu0 0.0
    %1389 = vmatprep.subr.mxu0 0.0
    %1390 = vmatpush1.msra.mxu0 0.0
    %1391 = vmatprep.subr.mxu0 0.0
    %1392 = vmatpush1.msra.mxu0 0.0
    %1393 = vmatprep.subr.mxu0 0.0
    %1394 = vmatpush1.msra.mxu0 0.0
    %1395 = vmatprep.subr.mxu0 0.0
    %1396 = vmatpush1.msra.mxu0 0.0
    %1397 = vmatprep.subr.mxu0 0.0
    %1398 = vmatpush1.msra.mxu0 0.0
    %1399 = vmatprep.subr.mxu0 0.0
    %1400 = vmatpush1.msra.mxu0 0.0
    %1401 = vmatprep.subr.mxu0 0.0
    %1402 = vmatpush1.msra.mxu0 0.0
    %1403 = vmatprep.subr.mxu0 0.0
    %1404 = vmatpush1.msra.mxu0 0.0
    %1405 = vmatprep.subr.mxu0 0.0
    %1406 = vmatpush1.msra.mxu0 0.0
    %1407 = vmatprep.subr.mxu0 0.0
    %1408 = vmatpush1.msra.mxu0 0.0
    %1409 = vmatprep.subr.mxu0 0.0
    %1410 = vmatpush1.msra.mxu0 0.0
    %1411 = vmatprep.subr.mxu0 0.0
    %1412 = vmatpush1.msra.mxu0 0.0
    %1413 = vmatprep.subr.mxu0 0.0
    %1414 = vmatpush1.msra.mxu0 0.0
    %1415 = vmatprep.subr.mxu0 0.0
    %1416 = vmatpush1.msra.mxu0 0.0
    %1417 = vmatprep.subr.mxu0 0.0
    %1418 = vmatpush1.msra.mxu0 0.0
    %1419 = vmatprep.subr.mxu0 0.0
    %1420 = vmatpush1.msra.mxu0 0.0
    %1421 = vmatprep.subr.mxu0 0.0
    %1422 = vmatpush1.msra.mxu0 0.0
    %1423 = vmatprep.subr.mxu0 0.0
    %1424 = vmatpush1.msra.mxu0 0.0
    %1425 = vmatprep.subr.mxu0 0.0
    %1426 = vmatpush1.msra.mxu0 0.0
    %1427 = vmatprep.mubr.f32.mxu0 0.0
    %1428 = vmatmul.mubr.f32.gmra.mrb[0].mxu0 %v1358
    %v1429 = vpop.f32.mrb[0].mxu0
    %v1430 = vadd.f32 0.0, %v1429
    %v1431 = vpop.f32.mrb[0].mxu0
    %1432 = vmatprep.mubr.f32.mxu0 0.0
    %1433 = vmatmul.mubr.f32.gmra.mrb[0].mxu0 %v1361
    %v1434 = vpop.f32.mrb[0].mxu0
    %v1435 = vadd.f32 0.0, %v1434
    %v1436 = vpop.f32.mrb[0].mxu0
    %1437 = vdwg.mxu0
    %v1438 = vld [vmem:[%s14] sm:$0x3]
    %v1440 = vsel %vm62, %v1438, 0
    %1442 = vmatprep.subr.mxu0 0.0
    %1443 = vmatpush1.msra.mxu0 %v1430
    %1444 = vmatprep.subr.mxu0 0.0
    %1445 = vmatpush1.msra.mxu0 %v1435
    %1446 = vmatprep.subr.mxu0 0.0
    %1447 = vmatpush1.msra.mxu0 0.0
    %1448 = vmatprep.subr.mxu0 0.0
    %1449 = vmatpush1.msra.mxu0 0.0
    %1450 = vmatprep.subr.mxu0 0.0
    %1451 = vmatpush1.msra.mxu0 0.0
    %1452 = vmatprep.subr.mxu0 0.0
    %1453 = vmatpush1.msra.mxu0 0.0
    %1454 = vmatprep.subr.mxu0 0.0
    %1455 = vmatpush1.msra.mxu0 0.0
    %1456 = vmatprep.subr.mxu0 0.0
    %1457 = vmatpush1.msra.mxu0 0.0
    %1458 = vmatprep.subr.mxu0 0.0
    %1459 = vmatpush1.msra.mxu0 0.0
    %1460 = vmatprep.subr.mxu0 0.0
    %1461 = vmatpush1.msra.mxu0 0.0
    %1462 = vmatprep.subr.mxu0 0.0
    %1463 = vmatpush1.msra.mxu0 0.0
    %1464 = vmatprep.subr.mxu0 0.0
    %1465 = vmatpush1.msra.mxu0 0.0
    %1466 = vmatprep.subr.mxu0 0.0
    %1467 = vmatpush1.msra.mxu0 0.0
    %1468 = vmatprep.subr.mxu0 0.0
    %1469 = vmatpush1.msra.mxu0 0.0
    %1470 = vmatprep.subr.mxu0 0.0
    %1471 = vmatpush1.msra.mxu0 0.0
    %1472 = vmatprep.subr.mxu0 0.0
    %1473 = vmatpush1.msra.mxu0 0.0
    %1474 = vmatprep.subr.mxu0 0.0
    %1475 = vmatpush1.msra.mxu0 0.0
    %1476 = vmatprep.subr.mxu0 0.0
    %1477 = vmatpush1.msra.mxu0 0.0
    %1478 = vmatprep.subr.mxu0 0.0
    %1479 = vmatpush1.msra.mxu0 0.0
    %1480 = vmatprep.subr.mxu0 0.0
    %1481 = vmatpush1.msra.mxu0 0.0
    %1482 = vmatprep.subr.mxu0 0.0
    %1483 = vmatpush1.msra.mxu0 0.0
    %1484 = vmatprep.subr.mxu0 0.0
    %1485 = vmatpush1.msra.mxu0 0.0
    %1486 = vmatprep.subr.mxu0 0.0
    %1487 = vmatpush1.msra.mxu0 0.0
    %1488 = vmatprep.subr.mxu0 0.0
    %1489 = vmatpush1.msra.mxu0 0.0
    %1490 = vmatprep.subr.mxu0 0.0
    %1491 = vmatpush1.msra.mxu0 0.0
    %1492 = vmatprep.subr.mxu0 0.0
    %1493 = vmatpush1.msra.mxu0 0.0
    %1494 = vmatprep.subr.mxu0 0.0
    %1495 = vmatpush1.msra.mxu0 0.0
    %1496 = vmatprep.subr.mxu0 0.0
    %1497 = vmatpush1.msra.mxu0 0.0
    %1498 = vmatprep.subr.mxu0 0.0
    %1499 = vmatpush1.msra.mxu0 0.0
    %1500 = vmatprep.subr.mxu0 0.0
    %1501 = vmatpush1.msra.mxu0 0.0
    %1502 = vmatprep.subr.mxu0 0.0
    %1503 = vmatpush1.msra.mxu0 0.0
    %1504 = vmatprep.subr.mxu0 0.0
    %1505 = vmatpush1.msra.mxu0 0.0
    %1506 = vmatprep.mubr.f32.mxu0 0.0
    %1507 = vmatmul.mubr.f32.gmra.mrb[0].mxu0 %v1440
    %v1508 = vpop.f32.mrb[0].mxu0
    %v1509 = vadd.f32 0.0, %v1508
    %v1510 = vpop.f32.mrb[0].mxu0
    %1511 = vdwg.mxu0
    %v1512 = vld [vmem:[%s15] sm:$0x3]
    %v1514 = vsel %vm62, %v1512, 0
    %1516 = vmatprep.subr.mxu0 0.0
    %1517 = vmatpush1.msra.mxu0 %v1430
    %1518 = vmatprep.subr.mxu0 0.0
    %1519 = vmatpush1.msra.mxu0 %v1435
    %1520 = vmatprep.subr.mxu0 0.0
    %1521 = vmatpush1.msra.mxu0 0.0
    %1522 = vmatprep.subr.mxu0 0.0
    %1523 = vmatpush1.msra.mxu0 0.0
    %1524 = vmatprep.subr.mxu0 0.0
    %1525 = vmatpush1.msra.mxu0 0.0
    %1526 = vmatprep.subr.mxu0 0.0
    %1527 = vmatpush1.msra.mxu0 0.0
    %1528 = vmatprep.subr.mxu0 0.0
    %1529 = vmatpush1.msra.mxu0 0.0
    %1530 = vmatprep.subr.mxu0 0.0
    %1531 = vmatpush1.msra.mxu0 0.0
    %1532 = vmatprep.subr.mxu0 0.0
    %1533 = vmatpush1.msra.mxu0 0.0
    %1534 = vmatprep.subr.mxu0 0.0
    %1535 = vmatpush1.msra.mxu0 0.0
    %1536 = vmatprep.subr.mxu0 0.0
    %1537 = vmatpush1.msra.mxu0 0.0
    %1538 = vmatprep.subr.mxu0 0.0
    %1539 = vmatpush1.msra.mxu0 0.0
    %1540 = vmatprep.subr.mxu0 0.0
    %1541 = vmatpush1.msra.mxu0 0.0
    %1542 = vmatprep.subr.mxu0 0.0
    %1543 = vmatpush1.msra.mxu0 0.0
    %1544 = vmatprep.subr.mxu0 0.0
    %1545 = vmatpush1.msra.mxu0 0.0
    %1546 = vmatprep.subr.mxu0 0.0
    %1547 = vmatpush1.msra.mxu0 0.0
    %1548 = vmatprep.subr.mxu0 0.0
    %1549 = vmatpush1.msra.mxu0 0.0
    %1550 = vmatprep.subr.mxu0 0.0
    %1551 = vmatpush1.msra.mxu0 0.0
    %1552 = vmatprep.subr.mxu0 0.0
    %1553 = vmatpush1.msra.mxu0 0.0
    %1554 = vmatprep.subr.mxu0 0.0
    %1555 = vmatpush1.msra.mxu0 0.0
    %1556 = vmatprep.subr.mxu0 0.0
    %1557 = vmatpush1.msra.mxu0 0.0
    %1558 = vmatprep.subr.mxu0 0.0
    %1559 = vmatpush1.msra.mxu0 0.0
    %1560 = vmatprep.subr.mxu0 0.0
    %1561 = vmatpush1.msra.mxu0 0.0
    %1562 = vmatprep.subr.mxu0 0.0
    %1563 = vmatpush1.msra.mxu0 0.0
    %1564 = vmatprep.subr.mxu0 0.0
    %1565 = vmatpush1.msra.mxu0 0.0
    %1566 = vmatprep.subr.mxu0 0.0
    %1567 = vmatpush1.msra.mxu0 0.0
    %1568 = vmatprep.subr.mxu0 0.0
    %1569 = vmatpush1.msra.mxu0 0.0
    %1570 = vmatprep.subr.mxu0 0.0
    %1571 = vmatpush1.msra.mxu0 0.0
    %1572 = vmatprep.subr.mxu0 0.0
    %1573 = vmatpush1.msra.mxu0 0.0
    %1574 = vmatprep.subr.mxu0 0.0
    %1575 = vmatpush1.msra.mxu0 0.0
    %1576 = vmatprep.subr.mxu0 0.0
    %1577 = vmatpush1.msra.mxu0 0.0
    %1578 = vmatprep.subr.mxu0 0.0
    %1579 = vmatpush1.msra.mxu0 0.0
    %1580 = vmatprep.mubr.f32.mxu0 0.0
    %1581 = vmatmul.mubr.f32.gmra.mrb[0].mxu0 %v1514
    %v1582 = vpop.f32.mrb[0].mxu0
    %v1583 = vadd.f32 0.0, %v1582
    %v1584 = vpop.f32.mrb[0].mxu0
    %1585 = vdwg.mxu0
    %1586 = vxpose.xlu0.b32.start [1/16] %v1509, 128
    %1587 = vxpose.xlu0.b32.cont [2/16] 0.0, 128
    %1588 = vxpose.xlu0.b32.cont [3/16] 0.0, 128
    %1589 = vxpose.xlu0.b32.cont [4/16] 0.0, 128
    %1590 = vxpose.xlu0.b32.cont [5/16] 0.0, 128
    %1591 = vxpose.xlu0.b32.cont [6/16] 0.0, 128
    %1592 = vxpose.xlu0.b32.cont [7/16] 0.0, 128
    %1593 = vxpose.xlu0.b32.cont [8/16] 0.0, 128
    %1594 = vxpose.xlu0.b32.cont [9/16] 0.0, 128
    %1595 = vxpose.xlu0.b32.cont [10/16] 0.0, 128
    %1596 = vxpose.xlu0.b32.cont [11/16] 0.0, 128
    %1597 = vxpose.xlu0.b32.cont [12/16] 0.0, 128
    %1598 = vxpose.xlu0.b32.cont [13/16] 0.0, 128
    %1599 = vxpose.xlu0.b32.cont [14/16] 0.0, 128
    %1600 = vxpose.xlu0.b32.cont [15/16] 0.0, 128
    %1601 = vxpose.xlu0.b32.end [16/16] 0.0, 128
    %v1602 = vpop.trf.xlu0
    %v1603 = vpop.trf.xlu0
    %v1604 = vpop.trf.xlu0
    %v1605 = vpop.trf.xlu0
    %v1606 = vpop.trf.xlu0
    %v1607 = vpop.trf.xlu0
    %v1608 = vpop.trf.xlu0
    %v1609 = vpop.trf.xlu0
    %v1610 = vpop.trf.xlu0
    %v1611 = vpop.trf.xlu0
    %v1612 = vpop.trf.xlu0
    %v1613 = vpop.trf.xlu0
    %v1614 = vpop.trf.xlu0
    %v1615 = vpop.trf.xlu0
    %v1616 = vpop.trf.xlu0
    %v1617 = vpop.trf.xlu0
    %v1618 = vld [vmem:[%s16] sm:$0xff]
    %vm1619 = vcmp.gt.f32.partialorder %v1618, 0.0
    %1621 = vset.pattern.permute.xlu0 0
    %1622 = vperm.xlu0 %1621, %v1602
    %v1623 = vpop.permute.xlu0 %1622
    %v1625 = vlaneseq
    %v1626 = vshrl.u32 %v1625, 7
    %v1627 = vsub.s32 0, %v1626
    %v1628 = vrot.slane %v1583, %v1627
    %v1629 = vadd.f32 %v1623, %v1628
    %vm1630 = vcmp.gt.f32.partialorder %v1629, 0.0
    %v1631 = vmul.f32 %v1629, 0.2
    %v1632 = vsel %vm1630, %v1629, %v1631
    %v1633 = vsel %vm1619, %v1632, -1e+09
    %v1634 = vsel %vm319, %v1633, -inf
    %1635 = vmax.xlane.f32.xlu0 %v1634
    %v1636 = vpop.xlane.xlu0 %1635
    %v1637 = vsub.f32 %v1633, %v1636
    %v1638 = vmul.f32 %v1637, 1.442695
    %v1639 = vpow.pop %v1638
    %v1640 = vsel %vm319, %v1639, 0.0
    %1641 = vadd.xlane.f32.xlu0 %v1640
    %v1642 = vpop.xlane.xlu0 %1641
    %v1643 = vrcp.pop %v1642
    %v1644 = vmul.f32 %v1639, %v1643
    %1645 = vset.pattern.permute.xlu0 1
    %1646 = vperm.xlu0 %1645, %v1602
    %v1647 = vpop.permute.xlu0 %1646
    %v1649 = vlaneseq
    %v1650 = vshrl.u32 %v1649, 7
    %v1651 = vsub.s32 1, %v1650
    %v1652 = vrot.slane %v1583, %v1651
    %v1653 = vadd.f32 %v1647, %v1652
    %vm1654 = vcmp.gt.f32.partialorder %v1653, 0.0
    %v1655 = vmul.f32 %v1653, 0.2
    %v1656 = vsel %vm1654, %v1653, %v1655
    %v1657 = vsel %vm1619, %v1656, -1e+09
    %v1658 = vsel %vm319, %v1657, -inf
    %1659 = vmax.xlane.f32.xlu0 %v1658
    %v1660 = vpop.xlane.xlu0 %1659
    %v1661 = vsub.f32 %v1657, %v1660
    %v1662 = vmul.f32 %v1661, 1.442695
    %v1663 = vpow.pop %v1662
    %v1664 = vsel %vm319, %v1663, 0.0
    %1665 = vadd.xlane.f32.xlu0 %v1664
    %v1666 = vpop.xlane.xlu0 %1665
    %v1667 = vrcp.pop %v1666
    %v1668 = vmul.f32 %v1663, %v1667
    %v1670 = vsel %vm319, %v1435, 0
    %v1673 = vsel %vm319, %v1668, 0
    %1675 = vmatprep.subr.mxu0 0.0
    %1676 = vmatpush1.xpose.msra.mxu0 %v1673
    %1677 = vmatprep.subr.mxu0 0.0
    %1678 = vmatpush1.xpose.msra.mxu0 0.0
    %1679 = vmatprep.subr.mxu0 0.0
    %1680 = vmatpush1.xpose.msra.mxu0 0.0
    %1681 = vmatprep.subr.mxu0 0.0
    %1682 = vmatpush1.xpose.msra.mxu0 0.0
    %1683 = vmatprep.subr.mxu0 0.0
    %1684 = vmatpush1.xpose.msra.mxu0 0.0
    %1685 = vmatprep.subr.mxu0 0.0
    %1686 = vmatpush1.xpose.msra.mxu0 0.0
    %1687 = vmatprep.subr.mxu0 0.0
    %1688 = vmatpush1.xpose.msra.mxu0 0.0
    %1689 = vmatprep.subr.mxu0 0.0
    %1690 = vmatpush1.xpose.msra.mxu0 0.0
    %1691 = vmatprep.subr.mxu0 0.0
    %1692 = vmatpush1.xpose.msra.mxu0 0.0
    %1693 = vmatprep.subr.mxu0 0.0
    %1694 = vmatpush1.xpose.msra.mxu0 0.0
    %1695 = vmatprep.subr.mxu0 0.0
    %1696 = vmatpush1.xpose.msra.mxu0 0.0
    %1697 = vmatprep.subr.mxu0 0.0
    %1698 = vmatpush1.xpose.msra.mxu0 0.0
    %1699 = vmatprep.subr.mxu0 0.0
    %1700 = vmatpush1.xpose.msra.mxu0 0.0
    %1701 = vmatprep.subr.mxu0 0.0
    %1702 = vmatpush1.xpose.msra.mxu0 0.0
    %1703 = vmatprep.subr.mxu0 0.0
    %1704 = vmatpush1.xpose.msra.mxu0 0.0
    %1705 = vmatprep.subr.mxu0 0.0
    %1706 = vmatpush1.xpose.msra.mxu0 0.0
    %1707 = vmatprep.subr.mxu0 0.0
    %1708 = vmatpush1.xpose.msra.mxu0 0.0
    %1709 = vmatprep.subr.mxu0 0.0
    %1710 = vmatpush1.xpose.msra.mxu0 0.0
    %1711 = vmatprep.subr.mxu0 0.0
    %1712 = vmatpush1.xpose.msra.mxu0 0.0
    %1713 = vmatprep.subr.mxu0 0.0
    %1714 = vmatpush1.xpose.msra.mxu0 0.0
    %1715 = vmatprep.subr.mxu0 0.0
    %1716 = vmatpush1.xpose.msra.mxu0 0.0
    %1717 = vmatprep.subr.mxu0 0.0
    %1718 = vmatpush1.xpose.msra.mxu0 0.0
    %1719 = vmatprep.subr.mxu0 0.0
    %1720 = vmatpush1.xpose.msra.mxu0 0.0
    %1721 = vmatprep.subr.mxu0 0.0
    %1722 = vmatpush1.xpose.msra.mxu0 0.0
    %1723 = vmatprep.subr.mxu0 0.0
    %1724 = vmatpush1.xpose.msra.mxu0 0.0
    %1725 = vmatprep.subr.mxu0 0.0
    %1726 = vmatpush1.xpose.msra.mxu0 0.0
    %1727 = vmatprep.subr.mxu0 0.0
    %1728 = vmatpush1.xpose.msra.mxu0 0.0
    %1729 = vmatprep.subr.mxu0 0.0
    %1730 = vmatpush1.xpose.msra.mxu0 0.0
    %1731 = vmatprep.subr.mxu0 0.0
    %1732 = vmatpush1.xpose.msra.mxu0 0.0
    %1733 = vmatprep.subr.mxu0 0.0
    %1734 = vmatpush1.xpose.msra.mxu0 0.0
    %1735 = vmatprep.subr.mxu0 0.0
    %1736 = vmatpush1.xpose.msra.mxu0 0.0
    %1737 = vmatprep.subr.mxu0 0.0
    %1738 = vmatpush1.xpose.msra.mxu0 0.0
    %1739 = vmatprep.mubr.f32.mxu0 0.0
    %1740 = vmatmul.mubr.f32.gmra.mrb[0].mxu0 %v1670
    %v1741 = vpop.f32.mrb[0].mxu0
    %v1742 = vadd.f32 0.0, %v1741
    %v1743 = vpop.f32.mrb[0].mxu0
    %1744 = vdwg.mxu0
    %v1746 = vsel %vm319, %v1430, 0
    %v1749 = vsel %vm319, %v1644, 0
    %1751 = vmatprep.subr.mxu0 0.0
    %1752 = vmatpush1.xpose.msra.mxu0 %v1749
    %1753 = vmatprep.subr.mxu0 0.0
    %1754 = vmatpush1.xpose.msra.mxu0 0.0
    %1755 = vmatprep.subr.mxu0 0.0
    %1756 = vmatpush1.xpose.msra.mxu0 0.0
    %1757 = vmatprep.subr.mxu0 0.0
    %1758 = vmatpush1.xpose.msra.mxu0 0.0
    %1759 = vmatprep.subr.mxu0 0.0
    %1760 = vmatpush1.xpose.msra.mxu0 0.0
    %1761 = vmatprep.subr.mxu0 0.0
    %1762 = vmatpush1.xpose.msra.mxu0 0.0
    %1763 = vmatprep.subr.mxu0 0.0
    %1764 = vmatpush1.xpose.msra.mxu0 0.0
    %1765 = vmatprep.subr.mxu0 0.0
    %1766 = vmatpush1.xpose.msra.mxu0 0.0
    %1767 = vmatprep.subr.mxu0 0.0
    %1768 = vmatpush1.xpose.msra.mxu0 0.0
    %1769 = vmatprep.subr.mxu0 0.0
    %1770 = vmatpush1.xpose.msra.mxu0 0.0
    %1771 = vmatprep.subr.mxu0 0.0
    %1772 = vmatpush1.xpose.msra.mxu0 0.0
    %1773 = vmatprep.subr.mxu0 0.0
    %1774 = vmatpush1.xpose.msra.mxu0 0.0
    %1775 = vmatprep.subr.mxu0 0.0
    %1776 = vmatpush1.xpose.msra.mxu0 0.0
    %1777 = vmatprep.subr.mxu0 0.0
    %1778 = vmatpush1.xpose.msra.mxu0 0.0
    %1779 = vmatprep.subr.mxu0 0.0
    %1780 = vmatpush1.xpose.msra.mxu0 0.0
    %1781 = vmatprep.subr.mxu0 0.0
    %1782 = vmatpush1.xpose.msra.mxu0 0.0
    %1783 = vmatprep.subr.mxu0 0.0
    %1784 = vmatpush1.xpose.msra.mxu0 0.0
    %1785 = vmatprep.subr.mxu0 0.0
    %1786 = vmatpush1.xpose.msra.mxu0 0.0
    %1787 = vmatprep.subr.mxu0 0.0
    %1788 = vmatpush1.xpose.msra.mxu0 0.0
    %1789 = vmatprep.subr.mxu0 0.0
    %1790 = vmatpush1.xpose.msra.mxu0 0.0
    %1791 = vmatprep.subr.mxu0 0.0
    %1792 = vmatpush1.xpose.msra.mxu0 0.0
    %1793 = vmatprep.subr.mxu0 0.0
    %1794 = vmatpush1.xpose.msra.mxu0 0.0
    %1795 = vmatprep.subr.mxu0 0.0
    %1796 = vmatpush1.xpose.msra.mxu0 0.0
    %1797 = vmatprep.subr.mxu0 0.0
    %1798 = vmatpush1.xpose.msra.mxu0 0.0
    %1799 = vmatprep.subr.mxu0 0.0
    %1800 = vmatpush1.xpose.msra.mxu0 0.0
    %1801 = vmatprep.subr.mxu0 0.0
    %1802 = vmatpush1.xpose.msra.mxu0 0.0
    %1803 = vmatprep.subr.mxu0 0.0
    %1804 = vmatpush1.xpose.msra.mxu0 0.0
    %1805 = vmatprep.subr.mxu0 0.0
    %1806 = vmatpush1.xpose.msra.mxu0 0.0
    %1807 = vmatprep.subr.mxu0 0.0
    %1808 = vmatpush1.xpose.msra.mxu0 0.0
    %1809 = vmatprep.subr.mxu0 0.0
    %1810 = vmatpush1.xpose.msra.mxu0 0.0
    %1811 = vmatprep.subr.mxu0 0.0
    %1812 = vmatpush1.xpose.msra.mxu0 0.0
    %1813 = vmatprep.subr.mxu0 0.0
    %1814 = vmatpush1.xpose.msra.mxu0 0.0
    %1815 = vmatprep.mubr.f32.mxu0 0.0
    %1816 = vmatmul.mubr.f32.gmra.mrb[0].mxu0 %v1746
    %v1817 = vpop.f32.mrb[0].mxu0
    %v1818 = vadd.f32 %v1742, %v1817
    %v1819 = vpop.f32.mrb[0].mxu0
    %1820 = vdwg.mxu0
    %v1821 = vmul.f32 %v1818, 0.5
    %v1822 = vadd.f32 %v1352, %v1821
    %1823 = vst.msk [vmem:[#allocation2] sm:$0xff] %vm319, %v1822
    %1825 = vset.pattern.permute.xlu0 0
    %1826 = vperm.xlu0 %1825, %v1603
    %v1827 = vpop.permute.xlu0 %1826
    %v1829 = vadd.f32 %v1827, %v1628
    %vm1830 = vcmp.gt.f32.partialorder %v1829, 0.0
    %v1831 = vmul.f32 %v1829, 0.2
    %v1832 = vsel %vm1830, %v1829, %v1831
    %1834 = vrot.lane.b32.xlu0 %v1832, 120
    %v1835 = vpop.permute.xlu0 %1834
    %v1837 = vsel %vm1619, %v1835, -1e+09
    %v1838 = vsel %vm319, %v1837, -inf
    %1839 = vmax.xlane.f32.xlu0 %v1838
    %v1840 = vpop.xlane.xlu0 %1839
    %v1841 = vsub.f32 %v1837, %v1840
    %v1842 = vmul.f32 %v1841, 1.442695
    %v1843 = vpow.pop %v1842
    %v1844 = vsel %vm319, %v1843, 0.0
    %1845 = vadd.xlane.f32.xlu0 %v1844
    %v1846 = vpop.xlane.xlu0 %1845
    %v1847 = vrcp.pop %v1846
    %v1848 = vmul.f32 %v1843, %v1847
    %1849 = vset.pattern.permute.xlu0 1
    %1850 = vperm.xlu0 %1849, %v1603
    %v1851 = vpop.permute.xlu0 %1850
    %v1853 = vadd.f32 %v1851, %v1652
    %vm1854 = vcmp.gt.f32.partialorder %v1853, 0.0
    %v1855 = vmul.f32 %v1853, 0.2
    %v1856 = vsel %vm1854, %v1853, %v1855
    %1858 = vrot.lane.b32.xlu0 %v1856, 120
    %v1859 = vpop.permute.xlu0 %1858
    %v1861 = vsel %vm1619, %v1859, -1e+09
    %v1862 = vsel %vm319, %v1861, -inf
    %1863 = vmax.xlane.f32.xlu0 %v1862
    %v1864 = vpop.xlane.xlu0 %1863
    %v1865 = vsub.f32 %v1861, %v1864
    %v1866 = vmul.f32 %v1865, 1.442695
    %v1867 = vpow.pop %v1866
    %v1868 = vsel %vm319, %v1867, 0.0
    %1869 = vadd.xlane.f32.xlu0 %v1868
    %v1870 = vpop.xlane.xlu0 %1869
    %v1871 = vrcp.pop %v1870
    %v1872 = vmul.f32 %v1867, %v1871
    %1873 = vrot.lane.b32.xlu0 %v1435, 120
    %v1874 = vpop.permute.xlu0 %1873
    %v1875 = vsel %vm319, %v1874, 0
    %v1878 = vsel %vm319, %v1872, 0
    %1880 = vmatprep.subr.mxu0 0.0
    %1881 = vmatpush1.xpose.msra.mxu0 %v1878
    %1882 = vmatprep.subr.mxu0 0.0
    %1883 = vmatpush1.xpose.msra.mxu0 0.0
    %1884 = vmatprep.subr.mxu0 0.0
    %1885 = vmatpush1.xpose.msra.mxu0 0.0
    %1886 = vmatprep.subr.mxu0 0.0
    %1887 = vmatpush1.xpose.msra.mxu0 0.0
    %1888 = vmatprep.subr.mxu0 0.0
    %1889 = vmatpush1.xpose.msra.mxu0 0.0
    %1890 = vmatprep.subr.mxu0 0.0
    %1891 = vmatpush1.xpose.msra.mxu0 0.0
    %1892 = vmatprep.subr.mxu0 0.0
    %1893 = vmatpush1.xpose.msra.mxu0 0.0
    %1894 = vmatprep.subr.mxu0 0.0
    %1895 = vmatpush1.xpose.msra.mxu0 0.0
    %1896 = vmatprep.subr.mxu0 0.0
    %1897 = vmatpush1.xpose.msra.mxu0 0.0
    %1898 = vmatprep.subr.mxu0 0.0
    %1899 = vmatpush1.xpose.msra.mxu0 0.0
    %1900 = vmatprep.subr.mxu0 0.0
    %1901 = vmatpush1.xpose.msra.mxu0 0.0
    %1902 = vmatprep.subr.mxu0 0.0
    %1903 = vmatpush1.xpose.msra.mxu0 0.0
    %1904 = vmatprep.subr.mxu0 0.0
    %1905 = vmatpush1.xpose.msra.mxu0 0.0
    %1906 = vmatprep.subr.mxu0 0.0
    %1907 = vmatpush1.xpose.msra.mxu0 0.0
    %1908 = vmatprep.subr.mxu0 0.0
    %1909 = vmatpush1.xpose.msra.mxu0 0.0
    %1910 = vmatprep.subr.mxu0 0.0
    %1911 = vmatpush1.xpose.msra.mxu0 0.0
    %1912 = vmatprep.subr.mxu0 0.0
    %1913 = vmatpush1.xpose.msra.mxu0 0.0
    %1914 = vmatprep.subr.mxu0 0.0
    %1915 = vmatpush1.xpose.msra.mxu0 0.0
    %1916 = vmatprep.subr.mxu0 0.0
    %1917 = vmatpush1.xpose.msra.mxu0 0.0
    %1918 = vmatprep.subr.mxu0 0.0
    %1919 = vmatpush1.xpose.msra.mxu0 0.0
    %1920 = vmatprep.subr.mxu0 0.0
    %1921 = vmatpush1.xpose.msra.mxu0 0.0
    %1922 = vmatprep.subr.mxu0 0.0
    %1923 = vmatpush1.xpose.msra.mxu0 0.0
    %1924 = vmatprep.subr.mxu0 0.0
    %1925 = vmatpush1.xpose.msra.mxu0 0.0
    %1926 = vmatprep.subr.mxu0 0.0
    %1927 = vmatpush1.xpose.msra.mxu0 0.0
    %1928 = vmatprep.subr.mxu0 0.0
    %1929 = vmatpush1.xpose.msra.mxu0 0.0
    %1930 = vmatprep.subr.mxu0 0.0
    %1931 = vmatpush1.xpose.msra.mxu0 0.0
    %1932 = vmatprep.subr.mxu0 0.0
    %1933 = vmatpush1.xpose.msra.mxu0 0.0
    %1934 = vmatprep.subr.mxu0 0.0
    %1935 = vmatpush1.xpose.msra.mxu0 0.0
    %1936 = vmatprep.subr.mxu0 0.0
    %1937 = vmatpush1.xpose.msra.mxu0 0.0
    %1938 = vmatprep.subr.mxu0 0.0
    %1939 = vmatpush1.xpose.msra.mxu0 0.0
    %1940 = vmatprep.subr.mxu0 0.0
    %1941 = vmatpush1.xpose.msra.mxu0 0.0
    %1942 = vmatprep.subr.mxu0 0.0
    %1943 = vmatpush1.xpose.msra.mxu0 0.0
    %1944 = vmatprep.mubr.f32.mxu0 0.0
    %1945 = vmatmul.mubr.f32.gmra.mrb[0].mxu0 %v1875
    %v1946 = vpop.f32.mrb[0].mxu0
    %v1947 = vadd.f32 0.0, %v1946
    %v1948 = vpop.f32.mrb[0].mxu0
    %1949 = vdwg.mxu0
    %1950 = vrot.lane.b32.xlu0 %v1430, 120
    %v1951 = vpop.permute.xlu0 %1950
    %v1952 = vsel %vm319, %v1951, 0
    %v1955 = vsel %vm319, %v1848, 0
    %1957 = vmatprep.subr.mxu0 0.0
    %1958 = vmatpush1.xpose.msra.mxu0 %v1955
    %1959 = vmatprep.subr.mxu0 0.0
    %1960 = vmatpush1.xpose.msra.mxu0 0.0
    %1961 = vmatprep.subr.mxu0 0.0
    %1962 = vmatpush1.xpose.msra.mxu0 0.0
    %1963 = vmatprep.subr.mxu0 0.0
    %1964 = vmatpush1.xpose.msra.mxu0 0.0
    %1965 = vmatprep.subr.mxu0 0.0
    %1966 = vmatpush1.xpose.msra.mxu0 0.0
    %1967 = vmatprep.subr.mxu0 0.0
    %1968 = vmatpush1.xpose.msra.mxu0 0.0
    %1969 = vmatprep.subr.mxu0 0.0
    %1970 = vmatpush1.xpose.msra.mxu0 0.0
    %1971 = vmatprep.subr.mxu0 0.0
    %1972 = vmatpush1.xpose.msra.mxu0 0.0
    %1973 = vmatprep.subr.mxu0 0.0
    %1974 = vmatpush1.xpose.msra.mxu0 0.0
    %1975 = vmatprep.subr.mxu0 0.0
    %1976 = vmatpush1.xpose.msra.mxu0 0.0
    %1977 = vmatprep.subr.mxu0 0.0
    %1978 = vmatpush1.xpose.msra.mxu0 0.0
    %1979 = vmatprep.subr.mxu0 0.0
    %1980 = vmatpush1.xpose.msra.mxu0 0.0
    %1981 = vmatprep.subr.mxu0 0.0
    %1982 = vmatpush1.xpose.msra.mxu0 0.0
    %1983 = vmatprep.subr.mxu0 0.0
    %1984 = vmatpush1.xpose.msra.mxu0 0.0
    %1985 = vmatprep.subr.mxu0 0.0
    %1986 = vmatpush1.xpose.msra.mxu0 0.0
    %1987 = vmatprep.subr.mxu0 0.0
    %1988 = vmatpush1.xpose.msra.mxu0 0.0
    %1989 = vmatprep.subr.mxu0 0.0
    %1990 = vmatpush1.xpose.msra.mxu0 0.0
    %1991 = vmatprep.subr.mxu0 0.0
    %1992 = vmatpush1.xpose.msra.mxu0 0.0
    %1993 = vmatprep.subr.mxu0 0.0
    %1994 = vmatpush1.xpose.msra.mxu0 0.0
    %1995 = vmatprep.subr.mxu0 0.0
    %1996 = vmatpush1.xpose.msra.mxu0 0.0
    %1997 = vmatprep.subr.mxu0 0.0
    %1998 = vmatpush1.xpose.msra.mxu0 0.0
    %1999 = vmatprep.subr.mxu0 0.0
    %2000 = vmatpush1.xpose.msra.mxu0 0.0
    %2001 = vmatprep.subr.mxu0 0.0
    %2002 = vmatpush1.xpose.msra.mxu0 0.0
    %2003 = vmatprep.subr.mxu0 0.0
    %2004 = vmatpush1.xpose.msra.mxu0 0.0
    %2005 = vmatprep.subr.mxu0 0.0
    %2006 = vmatpush1.xpose.msra.mxu0 0.0
    %2007 = vmatprep.subr.mxu0 0.0
    %2008 = vmatpush1.xpose.msra.mxu0 0.0
    %2009 = vmatprep.subr.mxu0 0.0
    %2010 = vmatpush1.xpose.msra.mxu0 0.0
    %2011 = vmatprep.subr.mxu0 0.0
    %2012 = vmatpush1.xpose.msra.mxu0 0.0
    %2013 = vmatprep.subr.mxu0 0.0
    %2014 = vmatpush1.xpose.msra.mxu0 0.0
    %2015 = vmatprep.subr.mxu0 0.0
    %2016 = vmatpush1.xpose.msra.mxu0 0.0
    %2017 = vmatprep.subr.mxu0 0.0
    %2018 = vmatpush1.xpose.msra.mxu0 0.0
    %2019 = vmatprep.subr.mxu0 0.0
    %2020 = vmatpush1.xpose.msra.mxu0 0.0
    %2021 = vmatprep.mubr.f32.mxu0 0.0
    %2022 = vmatmul.mubr.f32.gmra.mrb[0].mxu0 %v1952
    %v2023 = vpop.f32.mrb[0].mxu0
    %v2024 = vadd.f32 %v1947, %v2023
    %v2025 = vpop.f32.mrb[0].mxu0
    %2026 = vdwg.mxu0
    %v2027 = vmul.f32 %v2024, 0.5
    %2029 = vrot.lane.b32.xlu0 %v2027, 8
    %v2030 = vpop.permute.xlu0 %2029
    %v2032 = vadd.f32 %v1352, %v2030
    %vm2033 = vcmask 130112
    %2034 = vst.msk [vmem:[#allocation2] sm:$0xff] %vm2033, %v2032
    // Predicated region
    $region70: #{tpu_custom_call.1} parent=1 // pred_check
      _
    $region71: #{tpu_custom_call.1} parent=1 // pred_check_branch
      %2036 = sbr.rel (0) target = $region73
    $region72: #{tpu_custom_call.1} parent=1 // pred_region
      %s2038 = ssub.s32 128, 128
      %2039 = vsyncadd [#allocation3], %s2038
      %s2041 = sshll.u32 [#allocation2], 4
      %s2042 = int_to_ptr.vmem [resolvable:$true] %s2041
      %2044 = dma.vmem_to_hbm [thread:$0]  %s2042, 128, %s17, [#allocation3]
    $region73: #{tpu_custom_call.1} parent=1 // pred_fallthru
      _
    // Predicated region
    $region74: #{tpu_custom_call.1} parent=1 // pred_check
      _
    $region75: #{tpu_custom_call.1} parent=1 // pred_check_branch
      %2046 = sbr.rel (0) target = $region77
    $region76: #{tpu_custom_call.1} parent=1 // pred_region
      %2047 = dma.done [#allocation3], 128
    $region77: #{tpu_custom_call.1} parent=1 // pred_fallthru
      _
    %2048 = vsyncpa [#allocation3], 1

</llo_original>
